<compile_context>
chip_gen: v5e
topology: v5e:2x2
jax: 0.10.0
libtpu: 0.0.40
codegen_flags: <defaults>
</compile_context>

<pallas_src>
import functools
import math

import jax
import jax.numpy as jnp
from jax.experimental import pallas as pl
from jax.experimental.pallas import tpu as pltpu

MATMUL_DTYPE = jnp.float32  # set to jnp.bfloat16 on v6e/v7x for extra MXU/HBM headroom


# ----------------------------- Pallas kernels ------------------------------

def _fused_linear_kernel(x_ref, w_ref, b_ref, *rest, ln, residual, activation, eps):
    """[optional LayerNorm] -> x @ W + b -> [optional GELU] -> [optional +residual]."""
    i = 0
    x = x_ref[...]
    if ln:
        g_ref, bb_ref = rest[i], rest[i + 1]
        i += 2
        mu = jnp.mean(x, axis=-1, keepdims=True)
        xc = x - mu
        var = jnp.mean(xc * xc, axis=-1, keepdims=True)
        x = xc * jax.lax.rsqrt(var + eps) * g_ref[...] + bb_ref[...]
    if residual:
        r_ref = rest[i]
        i += 1
    o_ref = rest[i]

    y = jnp.dot(x.astype(w_ref.dtype), w_ref[...], preferred_element_type=jnp.float32)
    y = y + b_ref[...]
    if activation == "gelu":
        # TODO(synk): HF ViT default is exact (erf) GELU; tanh-approx GELU used here
        # because erf has no guaranteed Mosaic lowering (differences ~1e-3).
        y = jax.nn.gelu(y, approximate=True)
    if residual:
        y = y + r_ref[...]
    o_ref[...] = y


def _layernorm_kernel(x_ref, g_ref, b_ref, o_ref, *, eps):
    x = x_ref[...]
    mu = jnp.mean(x, axis=-1, keepdims=True)
    xc = x - mu
    var = jnp.mean(xc * xc, axis=-1, keepdims=True)
    o_ref[...] = xc * jax.lax.rsqrt(var + eps) * g_ref[...] + b_ref[...]


def _attention_kernel(q_ref, k_ref, v_ref, o_ref, *, scale):
    """One (batch, head) tile: softmax(q k^T) v with scale folded into q."""
    q = (q_ref[0, 0] * scale).astype(MATMUL_DTYPE)   # (S, Dh)
    k = k_ref[0, 0].astype(MATMUL_DTYPE)
    v = v_ref[0, 0].astype(MATMUL_DTYPE)
    # q @ k.T without an explicit data transpose.
    s = jax.lax.dot_general(q, k, (((1,), (1,)), ((), ())),
                            preferred_element_type=jnp.float32)      # (S, S)
    s = s - jnp.max(s, axis=-1, keepdims=True)
    p = jnp.exp(s)
    p = p / jnp.sum(p, axis=-1, keepdims=True)
    o_ref[0, 0] = jnp.dot(p.astype(MATMUL_DTYPE), v,
                          preferred_element_type=jnp.float32)


# ----------------------------- kernel wrappers ------------------------------

def _token_tile(M):
    return M if M <= 128 else 128


def fused_linear(x, w, b, *, gamma=None, beta=None, residual=None,
                 activation=None, eps=1e-12):
    """x: (M, K) -> [LN] -> @ w (K, N) + b -> [GELU] -> [+ residual], tiled over M."""
    M, K = x.shape
    N = w.shape[1]
    tm = _token_tile(M)
    grid = (pl.cdiv(M, tm),)

    in_specs = [
        pl.BlockSpec((tm, K), lambda i: (i, 0)),
        pl.BlockSpec((K, N), lambda i: (0, 0)),
        pl.BlockSpec((1, N), lambda i: (0, 0)),
    ]
    args = [x, w.astype(MATMUL_DTYPE), b.reshape(1, N)]

    ln = gamma is not None
    if ln:
        in_specs += [pl.BlockSpec((1, K), lambda i: (0, 0)),
                     pl.BlockSpec((1, K), lambda i: (0, 0))]
        args += [gamma.reshape(1, K), beta.reshape(1, K)]
    if residual is not None:
        in_specs.append(pl.BlockSpec((tm, N), lambda i: (i, 0)))
        args.append(residual)

    bytes_accessed = 4 * (M * K + K * N + N + M * N)
    if residual is not None:
        bytes_accessed += 4 * M * N
    if ln:
        bytes_accessed += 4 * 2 * K

    return pl.pallas_call(
        functools.partial(_fused_linear_kernel, ln=ln,
                          residual=residual is not None,
                          activation=activation, eps=eps),
        grid=grid,
        in_specs=in_specs,
        out_specs=pl.BlockSpec((tm, N), lambda i: (i, 0)),
        out_shape=jax.ShapeDtypeStruct((M, N), jnp.float32),
        compiler_params=pltpu.CompilerParams(dimension_semantics=("parallel",)),
        cost_estimate=pl.CostEstimate(
            flops=2 * M * K * N,
            transcendentals=M * N if activation == "gelu" else 0,
            bytes_accessed=int(bytes_accessed)),
    )(*args)


def layernorm(x, g, b, eps=1e-12):
    """LayerNorm over the last dim of x: (M, D), tiled over M."""
    M, D = x.shape
    tm = _token_tile(M)
    return pl.pallas_call(
        functools.partial(_layernorm_kernel, eps=eps),
        grid=(pl.cdiv(M, tm),),
        in_specs=[pl.BlockSpec((tm, D), lambda i: (i, 0)),
                  pl.BlockSpec((1, D), lambda i: (0, 0)),
                  pl.BlockSpec((1, D), lambda i: (0, 0))],
        out_specs=pl.BlockSpec((tm, D), lambda i: (i, 0)),
        out_shape=jax.ShapeDtypeStruct((M, D), jnp.float32),
        compiler_params=pltpu.CompilerParams(dimension_semantics=("parallel",)),
        cost_estimate=pl.CostEstimate(flops=6 * M * D, transcendentals=0,
                                      bytes_accessed=4 * (2 * M * D + 2 * D)),
    )(x, g.reshape(1, D), b.reshape(1, D))


def attention(q, k, v, scale):
    """q, k, v: (B, nh, S, Dh) -> per-(batch, head) softmax attention."""
    B, nh, S, Dh = q.shape
    spec = pl.BlockSpec((1, 1, S, Dh), lambda b, h: (b, h, 0, 0))
    return pl.pallas_call(
        functools.partial(_attention_kernel, scale=scale),
        grid=(B, nh),
        in_specs=[spec, spec, spec],
        out_specs=spec,
        out_shape=jax.ShapeDtypeStruct((B, nh, S, Dh), jnp.float32),
        compiler_params=pltpu.CompilerParams(
            dimension_semantics=("parallel", "parallel")),
        cost_estimate=pl.CostEstimate(
            flops=4 * B * nh * S * S * Dh,
            transcendentals=B * nh * S * S,
            bytes_accessed=4 * 4 * B * nh * S * Dh),
    )(q, k, v)


# ------------------------------- ViT forward --------------------------------

CFG = dict(channels=3, image=16, patch=8, hidden=32, heads=4, mlp=64, layers=2)


def vit_forward(x, params, cfg=CFG):
    """x: (B, C, H, W) float32 (NCHW, like PyTorch). Returns last_hidden_state (B, S, D)."""
    B, C, H, W = x.shape
    P, D, nh = cfg["patch"], cfg["hidden"], cfg["heads"]
    Dh = D // nh

    # Patch embedding: Conv2d(C, D, kernel=P, stride=P) == patchify + matmul.
    xp = x.reshape(B, C, H // P, P, W // P, P)
    xp = xp.transpose(0, 2, 4, 1, 3, 5).reshape(B, (H // P) * (W // P), C * P * P)
    Np = xp.shape[1]
    emb = fused_linear(xp.reshape(B * Np, C * P * P),
                       params["patch_w"], params["patch_b"])
    emb = emb.reshape(B, Np, D)

    # Prepend CLS token, add position embeddings (dropout is a no-op in eval).
    cls = jnp.broadcast_to(params["cls"], (B, 1, D))
    h = jnp.concatenate([cls, emb], axis=1) + params["pos"]
    S = Np + 1
    h = h.reshape(B * S, D)

    scale = 1.0 / math.sqrt(Dh)
    for layer in params["layers"]:
        # --- self-attention block (pre-LN): LN1 fused into one QKV matmul ---
        qkv = fused_linear(h, layer["qkv_w"], layer["qkv_b"],
                           gamma=layer["ln1_g"], beta=layer["ln1_b"])      # (B*S, 3D)
        qkv = qkv.reshape(B, S, 3, nh, Dh).transpose(2, 0, 3, 1, 4)        # (3,B,nh,S,Dh)
        ctx = attention(qkv[0], qkv[1], qkv[2], scale)                     # (B,nh,S,Dh)
        ctx = ctx.transpose(0, 2, 1, 3).reshape(B * S, D)
        h = fused_linear(ctx, layer["o_w"], layer["o_b"], residual=h)      # proj + resid

        # --- MLP block (pre-LN): LN2 + fc1 + GELU fused; fc2 + residual fused ---
        m = fused_linear(h, layer["fc1_w"], layer["fc1_b"],
                         gamma=layer["ln2_g"], beta=layer["ln2_b"],
                         activation="gelu")
        h = fused_linear(m, layer["fc2_w"], layer["fc2_b"], residual=h)

    # Final layernorm -> last_hidden_state.
    # TODO(synk): HF ViTModel also has a pooler (tanh dense on CLS); the spec's
    # forward() only returns last_hidden_state, so it is omitted.
    out = layernorm(h, params["ln_f_g"], params["ln_f_b"])
    return out.reshape(B, S, D)


# ---------------------------- parameter init ---------------------------------

def init_params(key, cfg=CFG):
    C, P, D, mlp, L = cfg["channels"], cfg["patch"], cfg["hidden"], cfg["mlp"], cfg["layers"]
    Np = (cfg["image"] // P) ** 2
    S = Np + 1
    keys = jax.random.split(key, 3 + 4 * L)   # exact count -> no StopIteration
    scale = 0.02

    def w(k, shape):
        return scale * jax.random.normal(k, shape, dtype=jnp.float32)

    params = {
        "patch_w": w(keys[0], (C * P * P, D)),  # flattened Conv2d weight, transposed
        "patch_b": jnp.zeros((D,), jnp.float32),
        "cls": w(keys[1], (1, 1, D)),
        "pos": w(keys[2], (1, S, D)),
        "ln_f_g": jnp.ones((D,), jnp.float32),
        "ln_f_b": jnp.zeros((D,), jnp.float32),
        "layers": [],
    }
    for l in range(L):
        k0 = 3 + 4 * l
        params["layers"].append({
            "ln1_g": jnp.ones((D,), jnp.float32), "ln1_b": jnp.zeros((D,), jnp.float32),
            # q/k/v pre-concatenated along the output dim -> single QKV matmul.
            "qkv_w": w(keys[k0 + 0], (D, 3 * D)),
            "qkv_b": jnp.zeros((3 * D,), jnp.float32),
            "o_w": w(keys[k0 + 1], (D, D)), "o_b": jnp.zeros((D,), jnp.float32),
            "ln2_g": jnp.ones((D,), jnp.float32), "ln2_b": jnp.zeros((D,), jnp.float32),
            "fc1_w": w(keys[k0 + 2], (D, mlp)), "fc1_b": jnp.zeros((mlp,), jnp.float32),
            "fc2_w": w(keys[k0 + 3], (mlp, D)), "fc2_b": jnp.zeros((D,), jnp.float32),
        })
    return params


# --------------------------------- main --------------------------------------

if __name__ == "__main__":
    key = jax.random.PRNGKey(0)
    pkey, xkey = jax.random.split(key)
    params = init_params(pkey)

    B = 2
    x = jax.random.normal(
        xkey, (B, CFG["channels"], CFG["image"], CFG["image"]), dtype=jnp.float32
    )

    fwd = jax.jit(vit_forward)
    out = jax.block_until_ready(fwd(x, params))

    S = (CFG["image"] // CFG["patch"]) ** 2 + 1
    assert out.shape == (B, S, CFG["hidden"]), out.shape
    assert bool(jnp.all(jnp.isfinite(out)))
    print("KERNEL_OK")
</pallas_src>

<mosaic_0001>
module attributes {stable_mosaic.version = 11 : i64} {
  func.func @_fused_linear_kernel(%arg0: i32, %arg1: memref<8x192xf32, #tpu.memory_space<vmem>>, %arg2: memref<192x32xf32, #tpu.memory_space<vmem>>, %arg3: memref<1x32xf32, #tpu.memory_space<vmem>>, %arg4: memref<8x32xf32, #tpu.memory_space<vmem>>) attributes {dimension_semantics = [#tpu.dimension_semantics<parallel>], iteration_bounds = array<i64: 1>, scalar_prefetch = 0 : i64, scratch_operands = 0 : i64, tpu.core_type = #tpu.core_type<tc>, window_params = [{transform_indices = @transform_0, window_bounds = array<i64: 8, 192>}, {pipeline_mode = #tpu.pipeline_mode<synchronous>, transform_indices = @transform_1, window_bounds = array<i64: 192, 32>}, {pipeline_mode = #tpu.pipeline_mode<synchronous>, transform_indices = @transform_2, window_bounds = array<i64: 1, 32>}, {transform_indices = @transform_3, window_bounds = array<i64: 8, 32>}]} {
    %c0 = arith.constant 0 : index
    %c0_0 = arith.constant 0 : index
    %0 = vector.load %arg1[%c0, %c0_0] : memref<8x192xf32, #tpu.memory_space<vmem>>, vector<8x192xf32>
    %c0_1 = arith.constant 0 : index
    %c0_2 = arith.constant 0 : index
    %1 = vector.load %arg2[%c0_1, %c0_2] : memref<192x32xf32, #tpu.memory_space<vmem>>, vector<192x32xf32>
    %cst = arith.constant dense<0.000000e+00> : vector<8x32xf32>
    %2 = tpu.matmul %0, %1, %cst {dimension_numbers = #tpu.dot_dimension_numbers<[1], [0], [0], [1], [0, 0, 1, 1], [], []>} : vector<8x192xf32>, vector<192x32xf32>, vector<8x32xf32> -> vector<8x32xf32>
    %c0_3 = arith.constant 0 : index
    %c0_4 = arith.constant 0 : index
    %3 = vector.load %arg3[%c0_3, %c0_4] : memref<1x32xf32, #tpu.memory_space<vmem>>, vector<1x32xf32>
    %4 = vector.broadcast %3 : vector<1x32xf32> to vector<8x32xf32>
    %5 = arith.addf %2, %4 : vector<8x32xf32>
    %c0_5 = arith.constant 0 : index
    %c0_6 = arith.constant 0 : index
    %6 = vector.load %arg4[%c0_5, %c0_6] : memref<8x32xf32, #tpu.memory_space<vmem>>, vector<8x32xf32>
    tpu.vector_store %arg4[%c0_5, %c0_6], %5 {strides = array<i32>} : memref<8x32xf32, #tpu.memory_space<vmem>>, vector<8x32xf32>,
    return
  }
  func.func @transform_0(%arg0: i32) -> (i32, i32) {
    %c0_i32 = arith.constant 0 : i32
    %c0_i32_0 = arith.constant 0 : i32
    return %arg0, %c0_i32 : i32, i32
  }
  func.func @transform_1(%arg0: i32) -> (i32, i32) {
    %c0_i32 = arith.constant 0 : i32
    %c0_i32_0 = arith.constant 0 : i32
    %c0_i32_1 = arith.constant 0 : i32
    return %c0_i32, %c0_i32_0 : i32, i32
  }
  func.func @transform_2(%arg0: i32) -> (i32, i32) {
    %c0_i32 = arith.constant 0 : i32
    %c0_i32_0 = arith.constant 0 : i32
    %c0_i32_1 = arith.constant 0 : i32
    return %c0_i32, %c0_i32_0 : i32, i32
  }
  func.func @transform_3(%arg0: i32) -> (i32, i32) {
    %c0_i32 = arith.constant 0 : i32
    %c0_i32_0 = arith.constant 0 : i32
    return %arg0, %c0_i32 : i32, i32
  }
}

module attributes {stable_mosaic.version = 11 : i64} {
  func.func @_fused_linear_kernel(%arg0: i32, %arg1: memref<10x32xf32, #tpu.memory_space<vmem>>, %arg2: memref<32x96xf32, #tpu.memory_space<vmem>>, %arg3: memref<1x96xf32, #tpu.memory_space<vmem>>, %arg4: memref<1x32xf32, #tpu.memory_space<vmem>>, %arg5: memref<1x32xf32, #tpu.memory_space<vmem>>, %arg6: memref<10x96xf32, #tpu.memory_space<vmem>>) attributes {dimension_semantics = [#tpu.dimension_semantics<parallel>], iteration_bounds = array<i64: 1>, scalar_prefetch = 0 : i64, scratch_operands = 0 : i64, tpu.core_type = #tpu.core_type<tc>, window_params = [{transform_indices = @transform_0, window_bounds = array<i64: 10, 32>}, {pipeline_mode = #tpu.pipeline_mode<synchronous>, transform_indices = @transform_1, window_bounds = array<i64: 32, 96>}, {pipeline_mode = #tpu.pipeline_mode<synchronous>, transform_indices = @transform_2, window_bounds = array<i64: 1, 96>}, {pipeline_mode = #tpu.pipeline_mode<synchronous>, transform_indices = @transform_3, window_bounds = array<i64: 1, 32>}, {pipeline_mode = #tpu.pipeline_mode<synchronous>, transform_indices = @transform_4, window_bounds = array<i64: 1, 32>}, {transform_indices = @transform_5, window_bounds = array<i64: 10, 96>}]} {
    %c0 = arith.constant 0 : index
    %c0_0 = arith.constant 0 : index
    %0 = vector.load %arg1[%c0, %c0_0] : memref<10x32xf32, #tpu.memory_space<vmem>>, vector<10x32xf32>
    %cst = arith.constant dense<0.000000e+00> : vector<10xf32>
    %1 = vector.multi_reduction <add>, %0, %cst [1] : vector<10x32xf32> to vector<10xf32>
    %2 = vector.shape_cast %1 : vector<10xf32> to vector<10x1xf32>
    %cst_1 = arith.constant 3.200000e+01 : f32
    %3 = vector.broadcast %cst_1 : f32 to vector<10x1xf32>
    %4 = arith.divf %2, %3 : vector<10x1xf32>
    %5 = vector.broadcast %4 : vector<10x1xf32> to vector<10x32xf32>
    %6 = arith.subf %0, %5 : vector<10x32xf32>
    %7 = arith.mulf %6, %6 : vector<10x32xf32>
    %cst_2 = arith.constant dense<0.000000e+00> : vector<10xf32>
    %8 = vector.multi_reduction <add>, %7, %cst_2 [1] : vector<10x32xf32> to vector<10xf32>
    %9 = vector.shape_cast %8 : vector<10xf32> to vector<10x1xf32>
    %cst_3 = arith.constant 3.200000e+01 : f32
    %10 = vector.broadcast %cst_3 : f32 to vector<10x1xf32>
    %11 = arith.divf %9, %10 : vector<10x1xf32>
    %cst_4 = arith.constant 9.99999996E-13 : f32
    %12 = vector.broadcast %cst_4 : f32 to vector<10x1xf32>
    %13 = arith.addf %11, %12 : vector<10x1xf32>
    %14 = math.rsqrt %13 : vector<10x1xf32>
    %15 = vector.broadcast %14 : vector<10x1xf32> to vector<10x32xf32>
    %16 = arith.mulf %6, %15 : vector<10x32xf32>
    %c0_5 = arith.constant 0 : index
    %c0_6 = arith.constant 0 : index
    %17 = vector.load %arg4[%c0_5, %c0_6] : memref<1x32xf32, #tpu.memory_space<vmem>>, vector<1x32xf32>
    %18 = vector.broadcast %17 : vector<1x32xf32> to vector<10x32xf32>
    %19 = arith.mulf %16, %18 : vector<10x32xf32>
    %c0_7 = arith.constant 0 : index
    %c0_8 = arith.constant 0 : index
    %20 = vector.load %arg5[%c0_7, %c0_8] : memref<1x32xf32, #tpu.memory_space<vmem>>, vector<1x32xf32>
    %21 = vector.broadcast %20 : vector<1x32xf32> to vector<10x32xf32>
    %22 = arith.addf %19, %21 : vector<10x32xf32>
    %c0_9 = arith.constant 0 : index
    %c0_10 = arith.constant 0 : index
    %23 = vector.load %arg2[%c0_9, %c0_10] : memref<32x96xf32, #tpu.memory_space<vmem>>, vector<32x96xf32>
    %cst_11 = arith.constant dense<0.000000e+00> : vector<10x96xf32>
    %24 = tpu.matmul %22, %23, %cst_11 {dimension_numbers = #tpu.dot_dimension_numbers<[1], [0], [0], [1], [0, 0, 1, 1], [], []>} : vector<10x32xf32>, vector<32x96xf32>, vector<10x96xf32> -> vector<10x96xf32>
    %c0_12 = arith.constant 0 : index
    %c0_13 = arith.constant 0 : index
    %25 = vector.load %arg3[%c0_12, %c0_13] : memref<1x96xf32, #tpu.memory_space<vmem>>, vector<1x96xf32>
    %26 = vector.broadcast %25 : vector<1x96xf32> to vector<10x96xf32>
    %27 = arith.addf %24, %26 : vector<10x96xf32>
    %c0_14 = arith.constant 0 : index
    %c0_15 = arith.constant 0 : index
    %28 = vector.load %arg6[%c0_14, %c0_15] : memref<10x96xf32, #tpu.memory_space<vmem>>, vector<10x96xf32>
    tpu.vector_store %arg6[%c0_14, %c0_15], %27 {strides = array<i32>} : memref<10x96xf32, #tpu.memory_space<vmem>>, vector<10x96xf32>,
    return
  }
  func.func @transform_0(%arg0: i32) -> (i32, i32) {
    %c0_i32 = arith.constant 0 : i32
    %c0_i32_0 = arith.constant 0 : i32
    return %arg0, %c0_i32 : i32, i32
  }
  func.func @transform_1(%arg0: i32) -> (i32, i32) {
    %c0_i32 = arith.constant 0 : i32
    %c0_i32_0 = arith.constant 0 : i32
    %c0_i32_1 = arith.constant 0 : i32
    return %c0_i32, %c0_i32_0 : i32, i32
  }
  func.func @transform_2(%arg0: i32) -> (i32, i32) {
    %c0_i32 = arith.constant 0 : i32
    %c0_i32_0 = arith.constant 0 : i32
    %c0_i32_1 = arith.constant 0 : i32
    return %c0_i32, %c0_i32_0 : i32, i32
  }
  func.func @transform_3(%arg0: i32) -> (i32, i32) {
    %c0_i32 = arith.constant 0 : i32
    %c0_i32_0 = arith.constant 0 : i32
    %c0_i32_1 = arith.constant 0 : i32
    return %c0_i32, %c0_i32_0 : i32, i32
  }
  func.func @transform_4(%arg0: i32) -> (i32, i32) {
    %c0_i32 = arith.constant 0 : i32
    %c0_i32_0 = arith.constant 0 : i32
    %c0_i32_1 = arith.constant 0 : i32
    return %c0_i32, %c0_i32_0 : i32, i32
  }
  func.func @transform_5(%arg0: i32) -> (i32, i32) {
    %c0_i32 = arith.constant 0 : i32
    %c0_i32_0 = arith.constant 0 : i32
    return %arg0, %c0_i32 : i32, i32
  }
}

module attributes {stable_mosaic.version = 11 : i64} {
  func.func @_attention_kernel(%arg0: i32, %arg1: i32, %arg2: memref<1x1x5x8xf32, #tpu.memory_space<vmem>>, %arg3: memref<1x1x5x8xf32, #tpu.memory_space<vmem>>, %arg4: memref<1x1x5x8xf32, #tpu.memory_space<vmem>>, %arg5: memref<1x1x5x8xf32, #tpu.memory_space<vmem>>) attributes {dimension_semantics = [#tpu.dimension_semantics<parallel>, #tpu.dimension_semantics<parallel>], iteration_bounds = array<i64: 2, 4>, scalar_prefetch = 0 : i64, scratch_operands = 0 : i64, tpu.core_type = #tpu.core_type<tc>, window_params = [{transform_indices = @transform_0, window_bounds = array<i64: 1, 1, 5, 8>}, {transform_indices = @transform_1, window_bounds = array<i64: 1, 1, 5, 8>}, {transform_indices = @transform_2, window_bounds = array<i64: 1, 1, 5, 8>}, {transform_indices = @transform_3, window_bounds = array<i64: 1, 1, 5, 8>}]} {
    %c0 = arith.constant 0 : index
    %c0_0 = arith.constant 0 : index
    %c0_1 = arith.constant 0 : index
    %c0_2 = arith.constant 0 : index
    %0 = vector.load %arg2[%c0, %c0_0, %c0_1, %c0_2] : memref<1x1x5x8xf32, #tpu.memory_space<vmem>>, vector<1x1x5x8xf32>
    %1 = vector.shape_cast %0 : vector<1x1x5x8xf32> to vector<5x8xf32>
    %cst = arith.constant 0.353553385 : f32
    %2 = vector.broadcast %cst : f32 to vector<5x8xf32>
    %3 = arith.mulf %1, %2 : vector<5x8xf32>
    %c0_3 = arith.constant 0 : index
    %c0_4 = arith.constant 0 : index
    %c0_5 = arith.constant 0 : index
    %c0_6 = arith.constant 0 : index
    %4 = vector.load %arg3[%c0_3, %c0_4, %c0_5, %c0_6] : memref<1x1x5x8xf32, #tpu.memory_space<vmem>>, vector<1x1x5x8xf32>
    %5 = vector.shape_cast %4 : vector<1x1x5x8xf32> to vector<5x8xf32>
    %c0_7 = arith.constant 0 : index
    %c0_8 = arith.constant 0 : index
    %c0_9 = arith.constant 0 : index
    %c0_10 = arith.constant 0 : index
    %6 = vector.load %arg4[%c0_7, %c0_8, %c0_9, %c0_10] : memref<1x1x5x8xf32, #tpu.memory_space<vmem>>, vector<1x1x5x8xf32>
    %7 = vector.shape_cast %6 : vector<1x1x5x8xf32> to vector<5x8xf32>
    %cst_11 = arith.constant dense<0.000000e+00> : vector<5x5xf32>
    %8 = tpu.matmul %3, %5, %cst_11 {dimension_numbers = #tpu.dot_dimension_numbers<[1], [1], [0], [0], [0, 0, 1, 0], [], []>} : vector<5x8xf32>, vector<5x8xf32>, vector<5x5xf32> -> vector<5x5xf32>
    %cst_12 = arith.constant dense<0xFF800000> : vector<5xf32>
    %9 = vector.multi_reduction <maximumf>, %8, %cst_12 [1] : vector<5x5xf32> to vector<5xf32>
    %10 = vector.shape_cast %9 : vector<5xf32> to vector<5x1xf32>
    %11 = vector.broadcast %10 : vector<5x1xf32> to vector<5x5xf32>
    %12 = arith.subf %8, %11 : vector<5x5xf32>
    %13 = math.exp %12 : vector<5x5xf32>
    %cst_13 = arith.constant dense<0.000000e+00> : vector<5xf32>
    %14 = vector.multi_reduction <add>, %13, %cst_13 [1] : vector<5x5xf32> to vector<5xf32>
    %15 = vector.shape_cast %14 : vector<5xf32> to vector<5x1xf32>
    %16 = vector.broadcast %15 : vector<5x1xf32> to vector<5x5xf32>
    %17 = arith.divf %13, %16 : vector<5x5xf32>
    %cst_14 = arith.constant dense<0.000000e+00> : vector<5x8xf32>
    %18 = tpu.matmul %17, %7, %cst_14 {dimension_numbers = #tpu.dot_dimension_numbers<[1], [0], [0], [1], [0, 0, 1, 1], [], []>} : vector<5x5xf32>, vector<5x8xf32>, vector<5x8xf32> -> vector<5x8xf32>
    %c0_15 = arith.constant 0 : index
    %c0_16 = arith.constant 0 : index
    %c0_17 = arith.constant 0 : index
    %c0_18 = arith.constant 0 : index
    %19 = vector.load %arg5[%c0_15, %c0_16, %c0_17, %c0_18] : memref<1x1x5x8xf32, #tpu.memory_space<vmem>>, vector<1x1x5x8xf32>
    %20 = vector.shape_cast %19 : vector<1x1x5x8xf32> to vector<5x8xf32>
    %21 = vector.shape_cast %18 : vector<5x8xf32> to vector<1x1x5x8xf32>
    tpu.vector_store %arg5[%c0_15, %c0_16, %c0_17, %c0_18], %21 {strides = array<i32>} : memref<1x1x5x8xf32, #tpu.memory_space<vmem>>, vector<1x1x5x8xf32>,
    return
  }
  func.func @transform_0(%arg0: i32, %arg1: i32) -> (i32, i32, i32, i32) {
    %c0_i32 = arith.constant 0 : i32
    %c0_i32_0 = arith.constant 0 : i32
    %c0_i32_1 = arith.constant 0 : i32
    return %arg0, %arg1, %c0_i32, %c0_i32_0 : i32, i32, i32, i32
  }
  func.func @transform_1(%arg0: i32, %arg1: i32) -> (i32, i32, i32, i32) {
    %c0_i32 = arith.constant 0 : i32
    %c0_i32_0 = arith.constant 0 : i32
    %c0_i32_1 = arith.constant 0 : i32
    return %arg0, %arg1, %c0_i32, %c0_i32_0 : i32, i32, i32, i32
  }
  func.func @transform_2(%arg0: i32, %arg1: i32) -> (i32, i32, i32, i32) {
    %c0_i32 = arith.constant 0 : i32
    %c0_i32_0 = arith.constant 0 : i32
    %c0_i32_1 = arith.constant 0 : i32
    return %arg0, %arg1, %c0_i32, %c0_i32_0 : i32, i32, i32, i32
  }
  func.func @transform_3(%arg0: i32, %arg1: i32) -> (i32, i32, i32, i32) {
    %c0_i32 = arith.constant 0 : i32
    %c0_i32_0 = arith.constant 0 : i32
    %c0_i32_1 = arith.constant 0 : i32
    return %arg0, %arg1, %c0_i32, %c0_i32_0 : i32, i32, i32, i32
  }
}

module attributes {stable_mosaic.version = 11 : i64} {
  func.func @_fused_linear_kernel(%arg0: i32, %arg1: memref<10x32xf32, #tpu.memory_space<vmem>>, %arg2: memref<32x32xf32, #tpu.memory_space<vmem>>, %arg3: memref<1x32xf32, #tpu.memory_space<vmem>>, %arg4: memref<10x32xf32, #tpu.memory_space<vmem>>, %arg5: memref<10x32xf32, #tpu.memory_space<vmem>>) attributes {dimension_semantics = [#tpu.dimension_semantics<parallel>], iteration_bounds = array<i64: 1>, scalar_prefetch = 0 : i64, scratch_operands = 0 : i64, tpu.core_type = #tpu.core_type<tc>, window_params = [{transform_indices = @transform_0, window_bounds = array<i64: 10, 32>}, {pipeline_mode = #tpu.pipeline_mode<synchronous>, transform_indices = @transform_1, window_bounds = array<i64: 32, 32>}, {pipeline_mode = #tpu.pipeline_mode<synchronous>, transform_indices = @transform_2, window_bounds = array<i64: 1, 32>}, {transform_indices = @transform_3, window_bounds = array<i64: 10, 32>}, {transform_indices = @transform_4, window_bounds = array<i64: 10, 32>}]} {
    %c0 = arith.constant 0 : index
    %c0_0 = arith.constant 0 : index
    %0 = vector.load %arg1[%c0, %c0_0] : memref<10x32xf32, #tpu.memory_space<vmem>>, vector<10x32xf32>
    %c0_1 = arith.constant 0 : index
    %c0_2 = arith.constant 0 : index
    %1 = vector.load %arg2[%c0_1, %c0_2] : memref<32x32xf32, #tpu.memory_space<vmem>>, vector<32x32xf32>
    %cst = arith.constant dense<0.000000e+00> : vector<10x32xf32>
    %2 = tpu.matmul %0, %1, %cst {dimension_numbers = #tpu.dot_dimension_numbers<[1], [0], [0], [1], [0, 0, 1, 1], [], []>} : vector<10x32xf32>, vector<32x32xf32>, vector<10x32xf32> -> vector<10x32xf32>
    %c0_3 = arith.constant 0 : index
    %c0_4 = arith.constant 0 : index
    %3 = vector.load %arg3[%c0_3, %c0_4] : memref<1x32xf32, #tpu.memory_space<vmem>>, vector<1x32xf32>
    %4 = vector.broadcast %3 : vector<1x32xf32> to vector<10x32xf32>
    %5 = arith.addf %2, %4 : vector<10x32xf32>
    %c0_5 = arith.constant 0 : index
    %c0_6 = arith.constant 0 : index
    %6 = vector.load %arg4[%c0_5, %c0_6] : memref<10x32xf32, #tpu.memory_space<vmem>>, vector<10x32xf32>
    %7 = arith.addf %5, %6 : vector<10x32xf32>
    %c0_7 = arith.constant 0 : index
    %c0_8 = arith.constant 0 : index
    %8 = vector.load %arg5[%c0_7, %c0_8] : memref<10x32xf32, #tpu.memory_space<vmem>>, vector<10x32xf32>
    tpu.vector_store %arg5[%c0_7, %c0_8], %7 {strides = array<i32>} : memref<10x32xf32, #tpu.memory_space<vmem>>, vector<10x32xf32>,
    return
  }
  func.func @transform_0(%arg0: i32) -> (i32, i32) {
    %c0_i32 = arith.constant 0 : i32
    %c0_i32_0 = arith.constant 0 : i32
    return %arg0, %c0_i32 : i32, i32
  }
  func.func @transform_1(%arg0: i32) -> (i32, i32) {
    %c0_i32 = arith.constant 0 : i32
    %c0_i32_0 = arith.constant 0 : i32
    %c0_i32_1 = arith.constant 0 : i32
    return %c0_i32, %c0_i32_0 : i32, i32
  }
  func.func @transform_2(%arg0: i32) -> (i32, i32) {
    %c0_i32 = arith.constant 0 : i32
    %c0_i32_0 = arith.constant 0 : i32
    %c0_i32_1 = arith.constant 0 : i32
    return %c0_i32, %c0_i32_0 : i32, i32
  }
  func.func @transform_3(%arg0: i32) -> (i32, i32) {
    %c0_i32 = arith.constant 0 : i32
    %c0_i32_0 = arith.constant 0 : i32
    return %arg0, %c0_i32 : i32, i32
  }
  func.func @transform_4(%arg0: i32) -> (i32, i32) {
    %c0_i32 = arith.constant 0 : i32
    %c0_i32_0 = arith.constant 0 : i32
    return %arg0, %c0_i32 : i32, i32
  }
}

module attributes {stable_mosaic.version = 11 : i64} {
  func.func @_fused_linear_kernel(%arg0: i32, %arg1: memref<10x32xf32, #tpu.memory_space<vmem>>, %arg2: memref<32x64xf32, #tpu.memory_space<vmem>>, %arg3: memref<1x64xf32, #tpu.memory_space<vmem>>, %arg4: memref<1x32xf32, #tpu.memory_space<vmem>>, %arg5: memref<1x32xf32, #tpu.memory_space<vmem>>, %arg6: memref<10x64xf32, #tpu.memory_space<vmem>>) attributes {dimension_semantics = [#tpu.dimension_semantics<parallel>], iteration_bounds = array<i64: 1>, scalar_prefetch = 0 : i64, scratch_operands = 0 : i64, tpu.core_type = #tpu.core_type<tc>, window_params = [{transform_indices = @transform_0, window_bounds = array<i64: 10, 32>}, {pipeline_mode = #tpu.pipeline_mode<synchronous>, transform_indices = @transform_1, window_bounds = array<i64: 32, 64>}, {pipeline_mode = #tpu.pipeline_mode<synchronous>, transform_indices = @transform_2, window_bounds = array<i64: 1, 64>}, {pipeline_mode = #tpu.pipeline_mode<synchronous>, transform_indices = @transform_3, window_bounds = array<i64: 1, 32>}, {pipeline_mode = #tpu.pipeline_mode<synchronous>, transform_indices = @transform_4, window_bounds = array<i64: 1, 32>}, {transform_indices = @transform_5, window_bounds = array<i64: 10, 64>}]} {
    %c0 = arith.constant 0 : index
    %c0_0 = arith.constant 0 : index
    %0 = vector.load %arg1[%c0, %c0_0] : memref<10x32xf32, #tpu.memory_space<vmem>>, vector<10x32xf32>
    %cst = arith.constant dense<0.000000e+00> : vector<10xf32>
    %1 = vector.multi_reduction <add>, %0, %cst [1] : vector<10x32xf32> to vector<10xf32>
    %2 = vector.shape_cast %1 : vector<10xf32> to vector<10x1xf32>
    %cst_1 = arith.constant 3.200000e+01 : f32
    %3 = vector.broadcast %cst_1 : f32 to vector<10x1xf32>
    %4 = arith.divf %2, %3 : vector<10x1xf32>
    %5 = vector.broadcast %4 : vector<10x1xf32> to vector<10x32xf32>
    %6 = arith.subf %0, %5 : vector<10x32xf32>
    %7 = arith.mulf %6, %6 : vector<10x32xf32>
    %cst_2 = arith.constant dense<0.000000e+00> : vector<10xf32>
    %8 = vector.multi_reduction <add>, %7, %cst_2 [1] : vector<10x32xf32> to vector<10xf32>
    %9 = vector.shape_cast %8 : vector<10xf32> to vector<10x1xf32>
    %cst_3 = arith.constant 3.200000e+01 : f32
    %10 = vector.broadcast %cst_3 : f32 to vector<10x1xf32>
    %11 = arith.divf %9, %10 : vector<10x1xf32>
    %cst_4 = arith.constant 9.99999996E-13 : f32
    %12 = vector.broadcast %cst_4 : f32 to vector<10x1xf32>
    %13 = arith.addf %11, %12 : vector<10x1xf32>
    %14 = math.rsqrt %13 : vector<10x1xf32>
    %15 = vector.broadcast %14 : vector<10x1xf32> to vector<10x32xf32>
    %16 = arith.mulf %6, %15 : vector<10x32xf32>
    %c0_5 = arith.constant 0 : index
    %c0_6 = arith.constant 0 : index
    %17 = vector.load %arg4[%c0_5, %c0_6] : memref<1x32xf32, #tpu.memory_space<vmem>>, vector<1x32xf32>
    %18 = vector.broadcast %17 : vector<1x32xf32> to vector<10x32xf32>
    %19 = arith.mulf %16, %18 : vector<10x32xf32>
    %c0_7 = arith.constant 0 : index
    %c0_8 = arith.constant 0 : index
    %20 = vector.load %arg5[%c0_7, %c0_8] : memref<1x32xf32, #tpu.memory_space<vmem>>, vector<1x32xf32>
    %21 = vector.broadcast %20 : vector<1x32xf32> to vector<10x32xf32>
    %22 = arith.addf %19, %21 : vector<10x32xf32>
    %c0_9 = arith.constant 0 : index
    %c0_10 = arith.constant 0 : index
    %23 = vector.load %arg2[%c0_9, %c0_10] : memref<32x64xf32, #tpu.memory_space<vmem>>, vector<32x64xf32>
    %cst_11 = arith.constant dense<0.000000e+00> : vector<10x64xf32>
    %24 = tpu.matmul %22, %23, %cst_11 {dimension_numbers = #tpu.dot_dimension_numbers<[1], [0], [0], [1], [0, 0, 1, 1], [], []>} : vector<10x32xf32>, vector<32x64xf32>, vector<10x64xf32> -> vector<10x64xf32>
    %c0_12 = arith.constant 0 : index
    %c0_13 = arith.constant 0 : index
    %25 = vector.load %arg3[%c0_12, %c0_13] : memref<1x64xf32, #tpu.memory_space<vmem>>, vector<1x64xf32>
    %26 = vector.broadcast %25 : vector<1x64xf32> to vector<10x64xf32>
    %27 = arith.addf %24, %26 : vector<10x64xf32>
    %28 = arith.mulf %27, %27 : vector<10x64xf32>
    %29 = arith.mulf %27, %28 : vector<10x64xf32>
    %cst_14 = arith.constant 4.471500e-02 : f32
    %30 = vector.broadcast %cst_14 : f32 to vector<10x64xf32>
    %31 = arith.mulf %30, %29 : vector<10x64xf32>
    %32 = arith.addf %27, %31 : vector<10x64xf32>
    %cst_15 = arith.constant 0.797884583 : f32
    %33 = vector.broadcast %cst_15 : f32 to vector<10x64xf32>
    %34 = arith.mulf %33, %32 : vector<10x64xf32>
    %35 = math.tanh %34 : vector<10x64xf32>
    %cst_16 = arith.constant 1.000000e+00 : f32
    %36 = vector.broadcast %cst_16 : f32 to vector<10x64xf32>
    %37 = arith.addf %36, %35 : vector<10x64xf32>
    %cst_17 = arith.constant 5.000000e-01 : f32
    %38 = vector.broadcast %cst_17 : f32 to vector<10x64xf32>
    %39 = arith.mulf %38, %37 : vector<10x64xf32>
    %40 = arith.mulf %27, %39 : vector<10x64xf32>
    %c0_18 = arith.constant 0 : index
    %c0_19 = arith.constant 0 : index
    %41 = vector.load %arg6[%c0_18, %c0_19] : memref<10x64xf32, #tpu.memory_space<vmem>>, vector<10x64xf32>
    tpu.vector_store %arg6[%c0_18, %c0_19], %40 {strides = array<i32>} : memref<10x64xf32, #tpu.memory_space<vmem>>, vector<10x64xf32>,
    return
  }
  func.func @transform_0(%arg0: i32) -> (i32, i32) {
    %c0_i32 = arith.constant 0 : i32
    %c0_i32_0 = arith.constant 0 : i32
    return %arg0, %c0_i32 : i32, i32
  }
  func.func @transform_1(%arg0: i32) -> (i32, i32) {
    %c0_i32 = arith.constant 0 : i32
    %c0_i32_0 = arith.constant 0 : i32
    %c0_i32_1 = arith.constant 0 : i32
    return %c0_i32, %c0_i32_0 : i32, i32
  }
  func.func @transform_2(%arg0: i32) -> (i32, i32) {
    %c0_i32 = arith.constant 0 : i32
    %c0_i32_0 = arith.constant 0 : i32
    %c0_i32_1 = arith.constant 0 : i32
    return %c0_i32, %c0_i32_0 : i32, i32
  }
  func.func @transform_3(%arg0: i32) -> (i32, i32) {
    %c0_i32 = arith.constant 0 : i32
    %c0_i32_0 = arith.constant 0 : i32
    %c0_i32_1 = arith.constant 0 : i32
    return %c0_i32, %c0_i32_0 : i32, i32
  }
  func.func @transform_4(%arg0: i32) -> (i32, i32) {
    %c0_i32 = arith.constant 0 : i32
    %c0_i32_0 = arith.constant 0 : i32
    %c0_i32_1 = arith.constant 0 : i32
    return %c0_i32, %c0_i32_0 : i32, i32
  }
  func.func @transform_5(%arg0: i32) -> (i32, i32) {
    %c0_i32 = arith.constant 0 : i32
    %c0_i32_0 = arith.constant 0 : i32
    return %arg0, %c0_i32 : i32, i32
  }
}

module attributes {stable_mosaic.version = 11 : i64} {
  func.func @_fused_linear_kernel(%arg0: i32, %arg1: memref<10x64xf32, #tpu.memory_space<vmem>>, %arg2: memref<64x32xf32, #tpu.memory_space<vmem>>, %arg3: memref<1x32xf32, #tpu.memory_space<vmem>>, %arg4: memref<10x32xf32, #tpu.memory_space<vmem>>, %arg5: memref<10x32xf32, #tpu.memory_space<vmem>>) attributes {dimension_semantics = [#tpu.dimension_semantics<parallel>], iteration_bounds = array<i64: 1>, scalar_prefetch = 0 : i64, scratch_operands = 0 : i64, tpu.core_type = #tpu.core_type<tc>, window_params = [{transform_indices = @transform_0, window_bounds = array<i64: 10, 64>}, {pipeline_mode = #tpu.pipeline_mode<synchronous>, transform_indices = @transform_1, window_bounds = array<i64: 64, 32>}, {pipeline_mode = #tpu.pipeline_mode<synchronous>, transform_indices = @transform_2, window_bounds = array<i64: 1, 32>}, {transform_indices = @transform_3, window_bounds = array<i64: 10, 32>}, {transform_indices = @transform_4, window_bounds = array<i64: 10, 32>}]} {
    %c0 = arith.constant 0 : index
    %c0_0 = arith.constant 0 : index
    %0 = vector.load %arg1[%c0, %c0_0] : memref<10x64xf32, #tpu.memory_space<vmem>>, vector<10x64xf32>
    %c0_1 = arith.constant 0 : index
    %c0_2 = arith.constant 0 : index
    %1 = vector.load %arg2[%c0_1, %c0_2] : memref<64x32xf32, #tpu.memory_space<vmem>>, vector<64x32xf32>
    %cst = arith.constant dense<0.000000e+00> : vector<10x32xf32>
    %2 = tpu.matmul %0, %1, %cst {dimension_numbers = #tpu.dot_dimension_numbers<[1], [0], [0], [1], [0, 0, 1, 1], [], []>} : vector<10x64xf32>, vector<64x32xf32>, vector<10x32xf32> -> vector<10x32xf32>
    %c0_3 = arith.constant 0 : index
    %c0_4 = arith.constant 0 : index
    %3 = vector.load %arg3[%c0_3, %c0_4] : memref<1x32xf32, #tpu.memory_space<vmem>>, vector<1x32xf32>
    %4 = vector.broadcast %3 : vector<1x32xf32> to vector<10x32xf32>
    %5 = arith.addf %2, %4 : vector<10x32xf32>
    %c0_5 = arith.constant 0 : index
    %c0_6 = arith.constant 0 : index
    %6 = vector.load %arg4[%c0_5, %c0_6] : memref<10x32xf32, #tpu.memory_space<vmem>>, vector<10x32xf32>
    %7 = arith.addf %5, %6 : vector<10x32xf32>
    %c0_7 = arith.constant 0 : index
    %c0_8 = arith.constant 0 : index
    %8 = vector.load %arg5[%c0_7, %c0_8] : memref<10x32xf32, #tpu.memory_space<vmem>>, vector<10x32xf32>
    tpu.vector_store %arg5[%c0_7, %c0_8], %7 {strides = array<i32>} : memref<10x32xf32, #tpu.memory_space<vmem>>, vector<10x32xf32>,
    return
  }
  func.func @transform_0(%arg0: i32) -> (i32, i32) {
    %c0_i32 = arith.constant 0 : i32
    %c0_i32_0 = arith.constant 0 : i32
    return %arg0, %c0_i32 : i32, i32
  }
  func.func @transform_1(%arg0: i32) -> (i32, i32) {
    %c0_i32 = arith.constant 0 : i32
    %c0_i32_0 = arith.constant 0 : i32
    %c0_i32_1 = arith.constant 0 : i32
    return %c0_i32, %c0_i32_0 : i32, i32
  }
  func.func @transform_2(%arg0: i32) -> (i32, i32) {
    %c0_i32 = arith.constant 0 : i32
    %c0_i32_0 = arith.constant 0 : i32
    %c0_i32_1 = arith.constant 0 : i32
    return %c0_i32, %c0_i32_0 : i32, i32
  }
  func.func @transform_3(%arg0: i32) -> (i32, i32) {
    %c0_i32 = arith.constant 0 : i32
    %c0_i32_0 = arith.constant 0 : i32
    return %arg0, %c0_i32 : i32, i32
  }
  func.func @transform_4(%arg0: i32) -> (i32, i32) {
    %c0_i32 = arith.constant 0 : i32
    %c0_i32_0 = arith.constant 0 : i32
    return %arg0, %c0_i32 : i32, i32
  }
}

module attributes {stable_mosaic.version = 11 : i64} {
  func.func @_layernorm_kernel(%arg0: i32, %arg1: memref<10x32xf32, #tpu.memory_space<vmem>>, %arg2: memref<1x32xf32, #tpu.memory_space<vmem>>, %arg3: memref<1x32xf32, #tpu.memory_space<vmem>>, %arg4: memref<10x32xf32, #tpu.memory_space<vmem>>) attributes {dimension_semantics = [#tpu.dimension_semantics<parallel>], iteration_bounds = array<i64: 1>, scalar_prefetch = 0 : i64, scratch_operands = 0 : i64, tpu.core_type = #tpu.core_type<tc>, window_params = [{transform_indices = @transform_0, window_bounds = array<i64: 10, 32>}, {pipeline_mode = #tpu.pipeline_mode<synchronous>, transform_indices = @transform_1, window_bounds = array<i64: 1, 32>}, {pipeline_mode = #tpu.pipeline_mode<synchronous>, transform_indices = @transform_2, window_bounds = array<i64: 1, 32>}, {transform_indices = @transform_3, window_bounds = array<i64: 10, 32>}]} {
    %c0 = arith.constant 0 : index
    %c0_0 = arith.constant 0 : index
    %0 = vector.load %arg1[%c0, %c0_0] : memref<10x32xf32, #tpu.memory_space<vmem>>, vector<10x32xf32>
    %cst = arith.constant dense<0.000000e+00> : vector<10xf32>
    %1 = vector.multi_reduction <add>, %0, %cst [1] : vector<10x32xf32> to vector<10xf32>
    %2 = vector.shape_cast %1 : vector<10xf32> to vector<10x1xf32>
    %cst_1 = arith.constant 3.200000e+01 : f32
    %3 = vector.broadcast %cst_1 : f32 to vector<10x1xf32>
    %4 = arith.divf %2, %3 : vector<10x1xf32>
    %5 = vector.broadcast %4 : vector<10x1xf32> to vector<10x32xf32>
    %6 = arith.subf %0, %5 : vector<10x32xf32>
    %7 = arith.mulf %6, %6 : vector<10x32xf32>
    %cst_2 = arith.constant dense<0.000000e+00> : vector<10xf32>
    %8 = vector.multi_reduction <add>, %7, %cst_2 [1] : vector<10x32xf32> to vector<10xf32>
    %9 = vector.shape_cast %8 : vector<10xf32> to vector<10x1xf32>
    %cst_3 = arith.constant 3.200000e+01 : f32
    %10 = vector.broadcast %cst_3 : f32 to vector<10x1xf32>
    %11 = arith.divf %9, %10 : vector<10x1xf32>
    %cst_4 = arith.constant 9.99999996E-13 : f32
    %12 = vector.broadcast %cst_4 : f32 to vector<10x1xf32>
    %13 = arith.addf %11, %12 : vector<10x1xf32>
    %14 = math.rsqrt %13 : vector<10x1xf32>
    %15 = vector.broadcast %14 : vector<10x1xf32> to vector<10x32xf32>
    %16 = arith.mulf %6, %15 : vector<10x32xf32>
    %c0_5 = arith.constant 0 : index
    %c0_6 = arith.constant 0 : index
    %17 = vector.load %arg2[%c0_5, %c0_6] : memref<1x32xf32, #tpu.memory_space<vmem>>, vector<1x32xf32>
    %18 = vector.broadcast %17 : vector<1x32xf32> to vector<10x32xf32>
    %19 = arith.mulf %16, %18 : vector<10x32xf32>
    %c0_7 = arith.constant 0 : index
    %c0_8 = arith.constant 0 : index
    %20 = vector.load %arg3[%c0_7, %c0_8] : memref<1x32xf32, #tpu.memory_space<vmem>>, vector<1x32xf32>
    %21 = vector.broadcast %20 : vector<1x32xf32> to vector<10x32xf32>
    %22 = arith.addf %19, %21 : vector<10x32xf32>
    %c0_9 = arith.constant 0 : index
    %c0_10 = arith.constant 0 : index
    %23 = vector.load %arg4[%c0_9, %c0_10] : memref<10x32xf32, #tpu.memory_space<vmem>>, vector<10x32xf32>
    tpu.vector_store %arg4[%c0_9, %c0_10], %22 {strides = array<i32>} : memref<10x32xf32, #tpu.memory_space<vmem>>, vector<10x32xf32>,
    return
  }
  func.func @transform_0(%arg0: i32) -> (i32, i32) {
    %c0_i32 = arith.constant 0 : i32
    %c0_i32_0 = arith.constant 0 : i32
    return %arg0, %c0_i32 : i32, i32
  }
  func.func @transform_1(%arg0: i32) -> (i32, i32) {
    %c0_i32 = arith.constant 0 : i32
    %c0_i32_0 = arith.constant 0 : i32
    %c0_i32_1 = arith.constant 0 : i32
    return %c0_i32, %c0_i32_0 : i32, i32
  }
  func.func @transform_2(%arg0: i32) -> (i32, i32) {
    %c0_i32 = arith.constant 0 : i32
    %c0_i32_0 = arith.constant 0 : i32
    %c0_i32_1 = arith.constant 0 : i32
    return %c0_i32, %c0_i32_0 : i32, i32
  }
  func.func @transform_3(%arg0: i32) -> (i32, i32) {
    %c0_i32 = arith.constant 0 : i32
    %c0_i32_0 = arith.constant 0 : i32
    return %arg0, %c0_i32 : i32, i32
  }
}

</mosaic_0001>

<llo_original>
// kernel: vit_forward.12
$region0: #{vit_forward.12}
  #allocation0 [shape = 'u32[]', space=smem, size = 0x4, offset = 0x4, fixed_abs, tag = 'smem constant byte address 0x4 - core index']
  #allocation1 [shape = 'u32[72,128]{1,0:T(1,128)}', space=vmem, size = 0x9000, scoped, tag = 'internal scratch']
  %s0 = inlined_call_operand.vmem [shape: f32[8,192], index: 0, kind: input, shape index: {}]
  %s1 = inlined_call_operand.vmem [shape: f32[192,32], index: 1, kind: input, shape index: {}]
  %s2 = inlined_call_operand.vmem [shape: f32[1,32], index: 2, kind: input, shape index: {}]
  %s3 = inlined_call_operand.vmem [shape: f32[8,32], index: 3, kind: output, shape index: {}]
  %s4 = sld [smem:[#allocation0]]
  $region22: #{vit_forward.12} parent=0
    _
  %s6 = ssub.s32 1, %s4
  %s7 = scalar_select 0, %s6, %s4
  // Predicated region
  $region2: #{vit_forward.12} parent=0 // pred_check
    _
  $region3: #{vit_forward.12} parent=0 // pred_check_branch
    %9 = sbr.rel (0) target = $region5
  $region4: #{vit_forward.12} parent=0 // pred_region
    _
  $region5: #{vit_forward.12} parent=0 // pred_fallthru
    _
  // Predicated region
  $region6: #{vit_forward.12} parent=0 // pred_check
    _
  $region7: #{vit_forward.12} parent=0 // pred_check_branch
    %11 = sbr.rel (0) target = $region9
  $region8: #{vit_forward.12} parent=0 // pred_region
    _
  $region9: #{vit_forward.12} parent=0 // pred_fallthru
    _
  // Predicated region
  $region10: #{vit_forward.12} parent=0 // pred_check
    _
  $region11: #{vit_forward.12} parent=0 // pred_check_branch
    %13 = sbr.rel (0) target = $region13
  $region12: #{vit_forward.12} parent=0 // pred_region
    _
  $region13: #{vit_forward.12} parent=0 // pred_fallthru
    _
  %v14 = vld [vmem:[%s0] sm:$0xff]
  %v15 = vld [vmem:[%s0 + $0x8] sm:$0xff]
  %v16 = vld [vmem:[%s1] sm:$0xff]
  %v17 = vld [vmem:[%s1 + $0x8] sm:$0xff]
  %v18 = vld [vmem:[%s1 + $0x10] sm:$0xff]
  %v19 = vld [vmem:[%s1 + $0x18] sm:$0xff]
  %v20 = vld [vmem:[%s1 + $0x20] sm:$0xff]
  %v21 = vld [vmem:[%s1 + $0x28] sm:$0xff]
  %v22 = vld [vmem:[%s1 + $0x30] sm:$0xff]
  %v23 = vld [vmem:[%s1 + $0x38] sm:$0xff]
  %v24 = vld [vmem:[%s1 + $0x40] sm:$0xff]
  %v25 = vld [vmem:[%s1 + $0x48] sm:$0xff]
  %v26 = vld [vmem:[%s1 + $0x50] sm:$0xff]
  %v27 = vld [vmem:[%s1 + $0x58] sm:$0xff]
  %v28 = vld [vmem:[%s1 + $0x60] sm:$0xff]
  %v29 = vld [vmem:[%s1 + $0x68] sm:$0xff]
  %v30 = vld [vmem:[%s1 + $0x70] sm:$0xff]
  %v31 = vld [vmem:[%s1 + $0x78] sm:$0xff]
  %v32 = vld [vmem:[%s1 + $0x80] sm:$0xff]
  %v33 = vld [vmem:[%s1 + $0x88] sm:$0xff]
  %v34 = vld [vmem:[%s1 + $0x90] sm:$0xff]
  %v35 = vld [vmem:[%s1 + $0x98] sm:$0xff]
  %v36 = vld [vmem:[%s1 + $0xa0] sm:$0xff]
  %v37 = vld [vmem:[%s1 + $0xa8] sm:$0xff]
  %v38 = vld [vmem:[%s1 + $0xb0] sm:$0xff]
  %v39 = vld [vmem:[%s1 + $0xb8] sm:$0xff]
  %v40 = vld [vmem:[%s2] sm:$0x1]
  %v42 = vperm.slane %v40, 0
  %vm44 = vcmask 523264
  %v46 = vsel %vm44, %v15, 0
  %48 = vmatpush.msra.mxu0 %v31
  %49 = vmatpush.msra.mxu0 %v30
  %50 = vmatpush.msra.mxu0 %v29
  %51 = vmatpush.msra.mxu0 %v28
  %52 = vmatpush.msra.mxu0 %v27
  %53 = vmatpush.msra.mxu0 %v26
  %54 = vmatpush.msra.mxu0 %v25
  %55 = vmatpush.msra.mxu0 %v24
  %56 = vmatpush.msra.mxu0 %v23
  %57 = vmatpush.msra.mxu0 %v22
  %58 = vmatpush.msra.mxu0 %v21
  %59 = vmatpush.msra.mxu0 %v20
  %60 = vmatpush.msra.mxu0 %v19
  %61 = vmatpush.msra.mxu0 %v18
  %62 = vmatpush.msra.mxu0 %v17
  %63 = vmatpush.msra.mxu0 %v16
  %64 = vmatmul.f32.gmra.mxu0 %v14
  %v65 = vpop.f32.mrf.mxu0
  %v66 = vadd.f32 %v42, %v65
  %67 = vdwg.mxu0
  %68 = vmatpush.msra.mxu0 0.0
  %69 = vmatpush.msra.mxu0 0.0
  %70 = vmatpush.msra.mxu0 0.0
  %71 = vmatpush.msra.mxu0 0.0
  %72 = vmatpush.msra.mxu0 0.0
  %73 = vmatpush.msra.mxu0 0.0
  %74 = vmatpush.msra.mxu0 0.0
  %75 = vmatpush.msra.mxu0 0.0
  %76 = vmatpush.msra.mxu0 %v39
  %77 = vmatpush.msra.mxu0 %v38
  %78 = vmatpush.msra.mxu0 %v37
  %79 = vmatpush.msra.mxu0 %v36
  %80 = vmatpush.msra.mxu0 %v35
  %81 = vmatpush.msra.mxu0 %v34
  %82 = vmatpush.msra.mxu0 %v33
  %83 = vmatpush.msra.mxu0 %v32
  %84 = vmatmul.f32.gmra.mxu0 %v46
  %v85 = vpop.f32.mrf.mxu0
  %v86 = vadd.f32 %v66, %v85
  %87 = vdwg.mxu0
  %vm88 = vcmask 261120
  %89 = vst.msk [vmem:[%s3] sm:$0xff] %vm88, %v86
  // Predicated region
  $region14: #{vit_forward.12} parent=0 // pred_check
    _
  $region15: #{vit_forward.12} parent=0 // pred_check_branch
    %91 = sbr.rel (0) target = $region17
  $region16: #{vit_forward.12} parent=0 // pred_region
    _
  $region17: #{vit_forward.12} parent=0 // pred_fallthru
    _
  // Predicated region
  $region18: #{vit_forward.12} parent=0 // pred_check
    _
  $region19: #{vit_forward.12} parent=0 // pred_check_branch
    %93 = sbr.rel (0) target = $region21
  $region20: #{vit_forward.12} parent=0 // pred_region
    _
  $region21: #{vit_forward.12} parent=0 // pred_fallthru
    _

// kernel: vit_forward.13
$region0: #{vit_forward.13}
  #allocation0 [shape = 'u32[]', space=smem, size = 0x4, offset = 0x4, fixed_abs, tag = 'smem constant byte address 0x4 - core index']
  #allocation1 [shape = 'u32[72,128]{1,0:T(1,128)}', space=vmem, size = 0x9000, scoped, tag = 'internal scratch']
  %s0 = inlined_call_operand.vmem [shape: f32[10,32], index: 0, kind: input, shape index: {}]
  %s1 = inlined_call_operand.vmem [shape: f32[32,96], index: 1, kind: input, shape index: {}]
  %s2 = inlined_call_operand.vmem [shape: f32[1,96], index: 2, kind: input, shape index: {}]
  %s3 = inlined_call_operand.vmem [shape: f32[1,32], index: 3, kind: input, shape index: {}]
  %s4 = inlined_call_operand.vmem [shape: f32[1,32], index: 4, kind: input, shape index: {}]
  %s5 = inlined_call_operand.vmem [shape: f32[10,96], index: 5, kind: output, shape index: {}]
  %s6 = sld [smem:[#allocation0]]
  $region30: #{vit_forward.13} parent=0
    _
  %s8 = ssub.s32 1, %s6
  %s9 = scalar_select 0, %s8, %s6
  // Predicated region
  $region2: #{vit_forward.13} parent=0 // pred_check
    _
  $region3: #{vit_forward.13} parent=0 // pred_check_branch
    %11 = sbr.rel (0) target = $region5
  $region4: #{vit_forward.13} parent=0 // pred_region
    _
  $region5: #{vit_forward.13} parent=0 // pred_fallthru
    _
  // Predicated region
  $region6: #{vit_forward.13} parent=0 // pred_check
    _
  $region7: #{vit_forward.13} parent=0 // pred_check_branch
    %13 = sbr.rel (0) target = $region9
  $region8: #{vit_forward.13} parent=0 // pred_region
    _
  $region9: #{vit_forward.13} parent=0 // pred_fallthru
    _
  // Predicated region
  $region10: #{vit_forward.13} parent=0 // pred_check
    _
  $region11: #{vit_forward.13} parent=0 // pred_check_branch
    %15 = sbr.rel (0) target = $region13
  $region12: #{vit_forward.13} parent=0 // pred_region
    _
  $region13: #{vit_forward.13} parent=0 // pred_fallthru
    _
  // Predicated region
  $region14: #{vit_forward.13} parent=0 // pred_check
    _
  $region15: #{vit_forward.13} parent=0 // pred_check_branch
    %17 = sbr.rel (0) target = $region17
  $region16: #{vit_forward.13} parent=0 // pred_region
    _
  $region17: #{vit_forward.13} parent=0 // pred_fallthru
    _
  // Predicated region
  $region18: #{vit_forward.13} parent=0 // pred_check
    _
  $region19: #{vit_forward.13} parent=0 // pred_check_branch
    %19 = sbr.rel (0) target = $region21
  $region20: #{vit_forward.13} parent=0 // pred_region
    _
  $region21: #{vit_forward.13} parent=0 // pred_fallthru
    _
  %v20 = vld [vmem:[%s0] sm:$0xff]
  %v21 = vld [vmem:[%s0 + $0x8] sm:$0x3]
  %vm22 = vcmask 261120
  %v23 = vsel %vm22, %v20, 0.0
  %24 = vadd.xlane.f32.xlu0 %v23
  %v25 = vpop.xlane.xlu0 %24
  %vm26 = vcmask 254976
  %v27 = vsel %vm26, %v21, 0.0
  %28 = vadd.xlane.f32.xlu0 %v27
  %v29 = vpop.xlane.xlu0 %28
  %v30 = vrcp.pop 32.0
  %v31 = vmul.f32 32.0, %v30
  %v32 = vsub.f32 1.0, %v31
  %v33 = vmul.f32 %v30, %v32
  %v34 = vadd.f32 %v30, %v33
  %vm35 = vweird.f32 %v30
  %v36 = vsel %vm35, %v30, %v34
  %v37 = vmul.f32 %v25, %v36
  %v38 = vmul.f32 %v29, %v36
  %v39 = vsub.f32 %v20, %v37
  %v40 = vsub.f32 %v21, %v38
  %v41 = vmul.f32 %v39, %v39
  %v42 = vmul.f32 %v40, %v40
  %v43 = vsel %vm22, %v41, 0.0
  %44 = vadd.xlane.f32.xlu0 %v43
  %v45 = vpop.xlane.xlu0 %44
  %v46 = vsel %vm26, %v42, 0.0
  %47 = vadd.xlane.f32.xlu0 %v46
  %v48 = vpop.xlane.xlu0 %47
  %v49 = vmul.f32 %v45, %v36
  %v50 = vmul.f32 %v48, %v36
  %v51 = vadd.f32 %v49, 1e-12
  %v52 = vadd.f32 %v50, 1e-12
  %v53 = vrsqrt.pop %v51
  %v54 = vmul.f32 %v53, %v51
  %v55 = vmul.f32 %v54, %v53
  %v56 = vmul.f32 0.5, %v55
  %v57 = vsub.f32 1.5, %v56
  %v58 = vmul.f32 %v53, %v57
  %vm59 = vweird.f32 %v51
  %vm60 = vweird.f32 %v53
  %vm61 = vmor %vm59, %vm60
  %v62 = vsel %vm61, %v53, %v58
  %v63 = vrsqrt.pop %v52
  %v64 = vmul.f32 %v63, %v52
  %v65 = vmul.f32 %v64, %v63
  %v66 = vmul.f32 0.5, %v65
  %v67 = vsub.f32 1.5, %v66
  %v68 = vmul.f32 %v63, %v67
  %vm69 = vweird.f32 %v52
  %vm70 = vweird.f32 %v63
  %vm71 = vmor %vm69, %vm70
  %v72 = vsel %vm71, %v63, %v68
  %v73 = vmul.f32 %v39, %v62
  %v74 = vmul.f32 %v40, %v72
  %v75 = vld [vmem:[%s3] sm:$0x1]
  %v77 = vperm.slane %v75, 0
  %v79 = vmul.f32 %v73, %v77
  %v80 = vmul.f32 %v74, %v77
  %v81 = vld [vmem:[%s4] sm:$0x1]
  %v83 = vperm.slane %v81, 0
  %v85 = vadd.f32 %v79, %v83
  %v86 = vadd.f32 %v80, %v83
  %v87 = vld [vmem:[%s1] sm:$0xff]
  %v88 = vld [vmem:[%s1 + $0x8] sm:$0xff]
  %v89 = vld [vmem:[%s1 + $0x10] sm:$0xff]
  %v90 = vld [vmem:[%s1 + $0x18] sm:$0xff]
  %v91 = vld [vmem:[%s2] sm:$0x1]
  %v93 = vperm.slane %v91, 0
  %v96 = vsel %vm22, %v85, 0
  %v99 = vsel %vm22, %v86, 0
  %101 = vmatpush.msra.mxu0 0.0
  %102 = vmatpush.msra.mxu0 0.0
  %103 = vmatpush.msra.mxu0 0.0
  %104 = vmatpush.msra.mxu0 0.0
  %105 = vmatpush.msra.mxu0 0.0
  %106 = vmatpush.msra.mxu0 0.0
  %107 = vmatpush.msra.mxu0 0.0
  %108 = vmatpush.msra.mxu0 0.0
  %109 = vmatpush.msra.mxu0 0.0
  %110 = vmatpush.msra.mxu0 0.0
  %111 = vmatpush.msra.mxu0 0.0
  %112 = vmatpush.msra.mxu0 0.0
  %113 = vmatpush.msra.mxu0 %v90
  %114 = vmatpush.msra.mxu0 %v89
  %115 = vmatpush.msra.mxu0 %v88
  %116 = vmatpush.msra.mxu0 %v87
  %117 = vmatmul.f32.gmra.mxu0 %v96
  %v118 = vpop.f32.mrf.mxu0
  %v119 = vadd.f32 %v93, %v118
  %120 = vmatmul.f32.gmra.mxu0 %v99
  %v121 = vpop.f32.mrf.mxu0
  %v122 = vadd.f32 %v93, %v121
  %123 = vdwg.mxu0
  %vm124 = vcmask 785408
  %125 = vst.msk [vmem:[%s5] sm:$0xff] %vm124, %v119
  %vm126 = vcmask 779264
  %127 = vst.msk [vmem:[%s5 + $0x8] sm:$0x3] %vm126, %v122
  // Predicated region
  $region22: #{vit_forward.13} parent=0 // pred_check
    _
  $region23: #{vit_forward.13} parent=0 // pred_check_branch
    %129 = sbr.rel (0) target = $region25
  $region24: #{vit_forward.13} parent=0 // pred_region
    _
  $region25: #{vit_forward.13} parent=0 // pred_fallthru
    _
  // Predicated region
  $region26: #{vit_forward.13} parent=0 // pred_check
    _
  $region27: #{vit_forward.13} parent=0 // pred_check_branch
    %131 = sbr.rel (0) target = $region29
  $region28: #{vit_forward.13} parent=0 // pred_region
    _
  $region29: #{vit_forward.13} parent=0 // pred_fallthru
    _

// kernel: vit_forward.14
$region0: #{vit_forward.14}
  #allocation0 [shape = 'u32[]', space=smem, size = 0x4, offset = 0x4, fixed_abs, tag = 'smem constant byte address 0x4 - core index']
  #allocation1 [shape = 'u32[72,128]{1,0:T(1,128)}', space=vmem, size = 0x9000, scoped, tag = 'internal scratch']
  %s0 = inlined_call_operand.vmem [shape: f32[2,4,5,8], index: 0, kind: input, shape index: {}]
  %s1 = inlined_call_operand.vmem [shape: f32[2,4,5,8], index: 1, kind: input, shape index: {}]
  %s2 = inlined_call_operand.vmem [shape: f32[2,4,5,8], index: 2, kind: input, shape index: {}]
  %s3 = inlined_call_operand.vmem [shape: f32[2,4,5,8], index: 3, kind: output, shape index: {}]
  %s4 = sld [smem:[#allocation0]]
  $region45: #{vit_forward.14} parent=0
    _
  %s6 = ssub.s32 1, %s4
  %s7 = scalar_select 0, %s6, %s4
  loop: start=0, step=1, limit=10
  $region2: #{vit_forward.14} parent=0 // loop_pre_header
    _
  $region3: #{vit_forward.14} parent=0 // loop_header
    %s9 = sphi 0, %s13
    %p10 = scmp.ge.s32.totalorder %s9, 10
    %s16 = sphi 0, %s28
    %s17 = sphi 0, %s24
    %s18 = sphi 0, %s16
    %s19 = sphi 0, %s17
    %s20 = sphi 0, %s18
    %s21 = sphi 0, %s19
    %s33 = sphi 0, %s35
    %s36 = sphi 0, %s33
    %s37 = sphi 0, %s36
    %s53 = sphi 0, %s37
    %s61 = sphi 0, %s63
    %s64 = sphi 0, %s61
    %s65 = sphi 0, %s64
    %s81 = sphi 0, %s65
    %s89 = sphi 0, %s91
    %s92 = sphi 0, %s89
    %s93 = sphi 0, %s92
    %s109 = sphi 0, %s93
    %s117 = sphi 0, %s119
    %s120 = sphi 0, %s117
    %s121 = sphi 0, %s120
    %s137 = sphi 0, %s121
  $region4: #{vit_forward.14} parent=0 // loop_header_branch
    %12 = sbr.rel (%p10) target = $region8
  $region5: #{vit_forward.14} parent=0 // loop_body
    %s14 = ssub.s32 %s9, 1
    %s15 = ssub.s32 %s9, 2
    %s22 = sadd.s32 1, %s17
    %p23 = scmp.ge.s32.totalorder %s22, 4
    %s24 = scalar_select %p23, 0, %s22
    %s25 = sadd.s32 1, %s16
    %s26 = scalar_select %p23, %s25, %s16
    %p27 = scmp.ge.s32.totalorder %s26, 2
    %s28 = scalar_select %p27, 0, %s26
    %s29 = ssub.s32 %s16, %s28
    %s30 = ssub.s32 %s17, %s24
    %s31 = sor.u32 %s29, %s30
    %p32 = scmp.eq.s32.totalorder %s31, 0
    %s34 = sadd.s32 %s33, 1
    %s35 = scalar_select %p32, %s33, %s34
    %p38 = pneg %p32
    %p39 = scmp.eq.s32.totalorder %s9, 7
    %p40 = por %p38, %p39
    %p41 = scmp.ne.s32.totalorder %s33, %s36
    %p42 = scmp.eq.s32.totalorder %s9, 0
    %p43 = por %p41, %p42
    %p44 = scmp.ne.s32.totalorder %s33, %s36
    %p45 = scmp.eq.s32.totalorder %s14, 7
    %p46 = por %p44, %p45
    %p47 = scmp.ne.s32.totalorder %s36, %s37
    %p48 = scmp.eq.s32.totalorder %s14, 0
    %p49 = por %p47, %p48
    %p50 = scmp.ne.s32.totalorder %s36, %s37
    %p51 = scmp.eq.s32.totalorder %s15, 7
    %p52 = por %p50, %p51
    %p54 = scmp.ne.s32.totalorder %s37, %s53
    %p55 = scmp.eq.s32.totalorder %s15, 0
    %p56 = por %p54, %p55
    %s57 = ssub.s32 %s16, %s28
    %s58 = ssub.s32 %s17, %s24
    %s59 = sor.u32 %s57, %s58
    %p60 = scmp.eq.s32.totalorder %s59, 0
    %s62 = sadd.s32 %s61, 1
    %s63 = scalar_select %p60, %s61, %s62
    %p66 = pneg %p60
    %p67 = scmp.eq.s32.totalorder %s9, 7
    %p68 = por %p66, %p67
    %p69 = scmp.ne.s32.totalorder %s61, %s64
    %p70 = scmp.eq.s32.totalorder %s9, 0
    %p71 = por %p69, %p70
    %p72 = scmp.ne.s32.totalorder %s61, %s64
    %p73 = scmp.eq.s32.totalorder %s14, 7
    %p74 = por %p72, %p73
    %p75 = scmp.ne.s32.totalorder %s64, %s65
    %p76 = scmp.eq.s32.totalorder %s14, 0
    %p77 = por %p75, %p76
    %p78 = scmp.ne.s32.totalorder %s64, %s65
    %p79 = scmp.eq.s32.totalorder %s15, 7
    %p80 = por %p78, %p79
    %p82 = scmp.ne.s32.totalorder %s65, %s81
    %p83 = scmp.eq.s32.totalorder %s15, 0
    %p84 = por %p82, %p83
    %s85 = ssub.s32 %s16, %s28
    %s86 = ssub.s32 %s17, %s24
    %s87 = sor.u32 %s85, %s86
    %p88 = scmp.eq.s32.totalorder %s87, 0
    %s90 = sadd.s32 %s89, 1
    %s91 = scalar_select %p88, %s89, %s90
    %p94 = pneg %p88
    %p95 = scmp.eq.s32.totalorder %s9, 7
    %p96 = por %p94, %p95
    %p97 = scmp.ne.s32.totalorder %s89, %s92
    %p98 = scmp.eq.s32.totalorder %s9, 0
    %p99 = por %p97, %p98
    %p100 = scmp.ne.s32.totalorder %s89, %s92
    %p101 = scmp.eq.s32.totalorder %s14, 7
    %p102 = por %p100, %p101
    %p103 = scmp.ne.s32.totalorder %s92, %s93
    %p104 = scmp.eq.s32.totalorder %s14, 0
    %p105 = por %p103, %p104
    %p106 = scmp.ne.s32.totalorder %s92, %s93
    %p107 = scmp.eq.s32.totalorder %s15, 7
    %p108 = por %p106, %p107
    %p110 = scmp.ne.s32.totalorder %s93, %s109
    %p111 = scmp.eq.s32.totalorder %s15, 0
    %p112 = por %p110, %p111
    %s113 = ssub.s32 %s16, %s28
    %s114 = ssub.s32 %s17, %s24
    %s115 = sor.u32 %s113, %s114
    %p116 = scmp.eq.s32.totalorder %s115, 0
    %s118 = sadd.s32 %s117, 1
    %s119 = scalar_select %p116, %s117, %s118
    %p122 = pneg %p116
    %p123 = scmp.eq.s32.totalorder %s9, 7
    %p124 = por %p122, %p123
    %p125 = scmp.ne.s32.totalorder %s117, %s120
    %p126 = scmp.eq.s32.totalorder %s9, 0
    %p127 = por %p125, %p126
    %p128 = scmp.ne.s32.totalorder %s117, %s120
    %p129 = scmp.eq.s32.totalorder %s14, 7
    %p130 = por %p128, %p129
    %p131 = scmp.ne.s32.totalorder %s120, %s121
    %p132 = scmp.eq.s32.totalorder %s14, 0
    %p133 = por %p131, %p132
    %p134 = scmp.ne.s32.totalorder %s120, %s121
    %p135 = scmp.eq.s32.totalorder %s15, 7
    %p136 = por %p134, %p135
    %p138 = scmp.ne.s32.totalorder %s121, %s137
    %p139 = scmp.eq.s32.totalorder %s15, 0
    %p140 = por %p138, %p139
    %p141 = scmp.le.s32.totalorder 1, %s9
    %p142 = scmp.lt.s32.totalorder %s9, 9
    %p143 = pnand %p141, %p142
    %p144 = pneg %p143
    // Predicated region
    $region9: #{vit_forward.14} parent=5 // pred_check
      _
    $region10: #{vit_forward.14} parent=5 // pred_check_branch
      %146 = sbr.rel (%p143) target = $region12
    $region11: #{vit_forward.14} parent=5 // pred_region
      %s147 = ssub.s32 %s9, 1
    $region12: #{vit_forward.14} parent=5 // pred_fallthru
      _
    %p148 = scmp.lt.s32.totalorder %s9, 8
    // Predicated region
    $region13: #{vit_forward.14} parent=5 // pred_check
      %p149 = pneg %p148
    $region14: #{vit_forward.14} parent=5 // pred_check_branch
      %151 = sbr.rel (%p149) target = $region16
    $region15: #{vit_forward.14} parent=5 // pred_region
      // Predicated region
      $region17: #{vit_forward.14} parent=15 // pred_check
        %p152 = pneg %p43
      $region18: #{vit_forward.14} parent=15 // pred_check_branch
        %154 = sbr.rel (%p152) target = $region20
      $region19: #{vit_forward.14} parent=15 // pred_region
        %p155 = scmp.lt.s32.totalorder %s16, 1
        %s156 = scalar_select %p155, %s16, 1
        %p157 = scmp.lt.s32.totalorder %s17, 3
        %s158 = scalar_select %p157, %s17, 3
        %s159 = smul.addr %s156, 4
        %s160 = sadd.s32 %s158, %s159
        %s161 = smul.addr %s160, 8
        %s162 = scalar_lea.vmem %s0, %s161
      $region20: #{vit_forward.14} parent=15 // pred_fallthru
        _
      // Predicated region
      $region21: #{vit_forward.14} parent=15 // pred_check
        %p163 = pneg %p71
      $region22: #{vit_forward.14} parent=15 // pred_check_branch
        %165 = sbr.rel (%p163) target = $region24
      $region23: #{vit_forward.14} parent=15 // pred_region
        %p166 = scmp.lt.s32.totalorder %s16, 1
        %s167 = scalar_select %p166, %s16, 1
        %p168 = scmp.lt.s32.totalorder %s17, 3
        %s169 = scalar_select %p168, %s17, 3
        %s170 = smul.addr %s167, 4
        %s171 = sadd.s32 %s169, %s170
        %s172 = smul.addr %s171, 8
        %s173 = scalar_lea.vmem %s1, %s172
      $region24: #{vit_forward.14} parent=15 // pred_fallthru
        _
      // Predicated region
      $region25: #{vit_forward.14} parent=15 // pred_check
        %p174 = pneg %p99
      $region26: #{vit_forward.14} parent=15 // pred_check_branch
        %176 = sbr.rel (%p174) target = $region28
      $region27: #{vit_forward.14} parent=15 // pred_region
        %p177 = scmp.lt.s32.totalorder %s16, 1
        %s178 = scalar_select %p177, %s16, 1
        %p179 = scmp.lt.s32.totalorder %s17, 3
        %s180 = scalar_select %p179, %s17, 3
        %s181 = smul.addr %s178, 4
        %s182 = sadd.s32 %s180, %s181
        %s183 = smul.addr %s182, 8
        %s184 = scalar_lea.vmem %s2, %s183
      $region28: #{vit_forward.14} parent=15 // pred_fallthru
        _
    $region16: #{vit_forward.14} parent=5 // pred_fallthru
      _
    %p185 = scmp.le.s32.totalorder 1, %s9
    %p186 = scmp.lt.s32.totalorder %s9, 9
    %p187 = pnand %p185, %p186
    %p188 = pneg %p187
    // Predicated region
    $region29: #{vit_forward.14} parent=5 // pred_check
      _
    $region30: #{vit_forward.14} parent=5 // pred_check_branch
      %190 = sbr.rel (%p187) target = $region32
    $region31: #{vit_forward.14} parent=5 // pred_region
      %s191 = ssub.s32 %s9, 1
      %p192 = scmp.lt.s32.totalorder %s18, 1
      %s193 = scalar_select %p192, %s18, 1
      %p194 = scmp.lt.s32.totalorder %s19, 3
      %s195 = scalar_select %p194, %s19, 3
      %s196 = smul.addr %s193, 4
      %s197 = sadd.s32 %s195, %s196
      %s198 = smul.addr %s197, 8
      %s199 = scalar_lea.vmem %s0, %s198
      %p200 = pneg %p49
      %p201 = pneg %p46
      %p202 = scmp.lt.s32.totalorder %s18, 1
      %s203 = scalar_select %p202, %s18, 1
      %p204 = scmp.lt.s32.totalorder %s19, 3
      %s205 = scalar_select %p204, %s19, 3
      %s206 = smul.addr %s203, 4
      %s207 = sadd.s32 %s205, %s206
      %s208 = smul.addr %s207, 8
      %s209 = scalar_lea.vmem %s1, %s208
      %p210 = pneg %p77
      %p211 = pneg %p74
      %p212 = scmp.lt.s32.totalorder %s18, 1
      %s213 = scalar_select %p212, %s18, 1
      %p214 = scmp.lt.s32.totalorder %s19, 3
      %s215 = scalar_select %p214, %s19, 3
      %s216 = smul.addr %s213, 4
      %s217 = sadd.s32 %s215, %s216
      %s218 = smul.addr %s217, 8
      %s219 = scalar_lea.vmem %s2, %s218
      %p220 = pneg %p105
      %p221 = pneg %p102
      %p222 = pneg %p133
      %p223 = pneg %p130
      %p224 = scmp.lt.s32.totalorder %s18, 1
      %s225 = scalar_select %p224, %s18, 1
      %p226 = scmp.lt.s32.totalorder %s19, 3
      %s227 = scalar_select %p226, %s19, 3
      %s228 = smul.addr %s225, 4
      %s229 = sadd.s32 %s227, %s228
      %s230 = smul.addr %s229, 8
      %s231 = scalar_lea.vmem %s3, %s230
      %p232 = scmp.lt.s32.totalorder %s18, 1
      %s233 = scalar_select %p232, %s18, 1
      %p234 = scmp.lt.s32.totalorder %s19, 3
      %s235 = scalar_select %p234, %s19, 3
      %s236 = smul.addr %s233, 4
      %s237 = sadd.s32 %s235, %s236
      %s238 = smul.addr %s237, 8
      %s239 = scalar_lea.vmem %s0, %s238
      %p240 = scmp.lt.s32.totalorder %s18, 1
      %s241 = scalar_select %p240, %s18, 1
      %p242 = scmp.lt.s32.totalorder %s19, 3
      %s243 = scalar_select %p242, %s19, 3
      %s244 = smul.addr %s241, 4
      %s245 = sadd.s32 %s243, %s244
      %s246 = smul.addr %s245, 8
      %s247 = scalar_lea.vmem %s1, %s246
      %p248 = scmp.lt.s32.totalorder %s18, 1
      %s249 = scalar_select %p248, %s18, 1
      %p250 = scmp.lt.s32.totalorder %s19, 3
      %s251 = scalar_select %p250, %s19, 3
      %s252 = smul.addr %s249, 4
      %s253 = sadd.s32 %s251, %s252
      %s254 = smul.addr %s253, 8
      %s255 = scalar_lea.vmem %s2, %s254
      %p256 = scmp.lt.s32.totalorder %s18, 1
      %s257 = scalar_select %p256, %s18, 1
      %p258 = scmp.lt.s32.totalorder %s19, 3
      %s259 = scalar_select %p258, %s19, 3
      %s260 = smul.addr %s257, 4
      %s261 = sadd.s32 %s259, %s260
      %s262 = smul.addr %s261, 8
      %s263 = scalar_lea.vmem %s3, %s262
      %v264 = vld [vmem:[%s239] sm:$0x1f]
      %v265 = vmul.f32 %v264, 0.35355338
      %v266 = vld [vmem:[%s247] sm:$0x1f]
      %v267 = vld [vmem:[%s255] sm:$0x1f]
      %vm268 = vcmask 64512
      %v270 = vsel %vm268, %v265, 0
      %v273 = vsel %vm268, %v266, 0
      %275 = vmatpush.xpose.msra.mxu0 0.0
      %276 = vmatpush.xpose.msra.mxu0 0.0
      %277 = vmatpush.xpose.msra.mxu0 0.0
      %278 = vmatpush.xpose.msra.mxu0 0.0
      %279 = vmatpush.xpose.msra.mxu0 0.0
      %280 = vmatpush.xpose.msra.mxu0 0.0
      %281 = vmatpush.xpose.msra.mxu0 0.0
      %282 = vmatpush.xpose.msra.mxu0 0.0
      %283 = vmatpush.xpose.msra.mxu0 0.0
      %284 = vmatpush.xpose.msra.mxu0 0.0
      %285 = vmatpush.xpose.msra.mxu0 0.0
      %286 = vmatpush.xpose.msra.mxu0 0.0
      %287 = vmatpush.xpose.msra.mxu0 0.0
      %288 = vmatpush.xpose.msra.mxu0 0.0
      %289 = vmatpush.xpose.msra.mxu0 0.0
      %290 = vmatpush.xpose.msra.mxu0 %v273
      %291 = vmatmul.f32.gmra.mxu0 %v270
      %v292 = vpop.f32.mrf.mxu0
      %v293 = vadd.f32 0.0, %v292
      %294 = vdwg.mxu0
      %vm295 = vcmask 36864
      %v296 = vsel %vm295, %v293, -inf
      %297 = vmax.xlane.f32.xlu0 %v296
      %v298 = vpop.xlane.xlu0 %297
      %v299 = vsub.f32 %v293, %v298
      %v300 = vmul.f32 %v299, 1.442695
      %v301 = vpow.pop %v300
      %v302 = vsel %vm295, %v301, 0.0
      %303 = vadd.xlane.f32.xlu0 %v302
      %v304 = vpop.xlane.xlu0 %303
      %v305 = vrcp.pop %v304
      %v306 = vmul.f32 %v304, %v305
      %v307 = vsub.f32 1.0, %v306
      %v308 = vmul.f32 %v305, %v307
      %v309 = vadd.f32 %v305, %v308
      %vm310 = vweird.f32 %v304
      %vm311 = vweird.f32 %v305
      %vm312 = vmor %vm310, %vm311
      %v313 = vsel %vm312, %v305, %v309
      %v314 = vand.u32 2147483647, %v304
      %vm315 = vcmp.eq.f32.partialorder %v314, 8.507059e+37
      %v316 = vand.u32 %v304, 2147483648
      %v317 = vor.u32 1.1754944e-38, %v316
      %v318 = vsel %vm315, %v317, %v313
      %v319 = vmul.f32 %v301, %v318
      %vm320 = vcmask 39936
      %v322 = vsel %vm320, %v319, 0
      %vm324 = vcmask 1044480
      %v326 = vsel %vm324, %v267, 0
      %328 = vmatpush.msra.mxu0 0.0
      %329 = vmatpush.msra.mxu0 0.0
      %330 = vmatpush.msra.mxu0 0.0
      %331 = vmatpush.msra.mxu0 0.0
      %332 = vmatpush.msra.mxu0 0.0
      %333 = vmatpush.msra.mxu0 0.0
      %334 = vmatpush.msra.mxu0 0.0
      %335 = vmatpush.msra.mxu0 0.0
      %336 = vmatpush.msra.mxu0 0.0
      %337 = vmatpush.msra.mxu0 0.0
      %338 = vmatpush.msra.mxu0 0.0
      %339 = vmatpush.msra.mxu0 0.0
      %340 = vmatpush.msra.mxu0 0.0
      %341 = vmatpush.msra.mxu0 0.0
      %342 = vmatpush.msra.mxu0 0.0
      %343 = vmatpush.msra.mxu0 %v326
      %344 = vmatmul.f32.gmra.mxu0 %v322
      %v345 = vpop.f32.mrf.mxu0
      %v346 = vadd.f32 0.0, %v345
      %347 = vdwg.mxu0
      %vm348 = vcmask 61440
      %349 = vst.msk [vmem:[%s263] sm:$0x1f] %vm348, %v346
      %p350 = scmp.lt.s32.totalorder %s18, 1
      %s351 = scalar_select %p350, %s18, 1
      %p352 = scmp.lt.s32.totalorder %s19, 3
      %s353 = scalar_select %p352, %s19, 3
      %s354 = smul.addr %s351, 4
      %s355 = sadd.s32 %s353, %s354
      %s356 = smul.addr %s355, 8
      %s357 = scalar_lea.vmem %s3, %s356
      // Predicated region
      $region33: #{vit_forward.14} parent=31 // pred_check
        %p358 = pneg %p130
      $region34: #{vit_forward.14} parent=31 // pred_check_branch
        %360 = sbr.rel (%p358) target = $region36
      $region35: #{vit_forward.14} parent=31 // pred_region
        _
      $region36: #{vit_forward.14} parent=31 // pred_fallthru
        _
    $region32: #{vit_forward.14} parent=5 // pred_fallthru
      _
    %p361 = scmp.le.s32.totalorder 2, %s9
    // Predicated region
    $region37: #{vit_forward.14} parent=5 // pred_check
      %p362 = pneg %p361
    $region38: #{vit_forward.14} parent=5 // pred_check_branch
      %364 = sbr.rel (%p362) target = $region40
    $region39: #{vit_forward.14} parent=5 // pred_region
      %s365 = ssub.s32 %s9, 2
      // Predicated region
      $region41: #{vit_forward.14} parent=39 // pred_check
        %p366 = pneg %p136
      $region42: #{vit_forward.14} parent=39 // pred_check_branch
        %368 = sbr.rel (%p366) target = $region44
      $region43: #{vit_forward.14} parent=39 // pred_region
        %p369 = scmp.lt.s32.totalorder %s20, 1
        %s370 = scalar_select %p369, %s20, 1
        %p371 = scmp.lt.s32.totalorder %s21, 3
        %s372 = scalar_select %p371, %s21, 3
        %s373 = smul.addr %s370, 4
        %s374 = sadd.s32 %s372, %s373
        %s375 = smul.addr %s374, 8
        %s376 = scalar_lea.vmem %s3, %s375
      $region44: #{vit_forward.14} parent=39 // pred_fallthru
        _
    $region40: #{vit_forward.14} parent=5 // pred_fallthru
      _
  $region6: #{vit_forward.14} parent=0 // loop_footer
    %s13 = sadd.s32 1, %s9
  $region7: #{vit_forward.14} parent=0 // loop_footer_branch
    %8 = sbr.rel target = $region3
  $region8: #{vit_forward.14} parent=0 // loop_exit
    _

// kernel: vit_forward.15
$region0: #{vit_forward.15}
  #allocation0 [shape = 'u32[]', space=smem, size = 0x4, offset = 0x4, fixed_abs, tag = 'smem constant byte address 0x4 - core index']
  #allocation1 [shape = 'u32[72,128]{1,0:T(1,128)}', space=vmem, size = 0x9000, scoped, tag = 'internal scratch']
  %s0 = inlined_call_operand.vmem [shape: f32[10,32], index: 0, kind: input, shape index: {}]
  %s1 = inlined_call_operand.vmem [shape: f32[32,32], index: 1, kind: input, shape index: {}]
  %s2 = inlined_call_operand.vmem [shape: f32[1,32], index: 2, kind: input, shape index: {}]
  %s3 = inlined_call_operand.vmem [shape: f32[10,32], index: 3, kind: input, shape index: {}]
  %s4 = inlined_call_operand.vmem [shape: f32[10,32], index: 4, kind: output, shape index: {}]
  %s5 = sld [smem:[#allocation0]]
  $region26: #{vit_forward.15} parent=0
    _
  %s7 = ssub.s32 1, %s5
  %s8 = scalar_select 0, %s7, %s5
  // Predicated region
  $region2: #{vit_forward.15} parent=0 // pred_check
    _
  $region3: #{vit_forward.15} parent=0 // pred_check_branch
    %10 = sbr.rel (0) target = $region5
  $region4: #{vit_forward.15} parent=0 // pred_region
    _
  $region5: #{vit_forward.15} parent=0 // pred_fallthru
    _
  // Predicated region
  $region6: #{vit_forward.15} parent=0 // pred_check
    _
  $region7: #{vit_forward.15} parent=0 // pred_check_branch
    %12 = sbr.rel (0) target = $region9
  $region8: #{vit_forward.15} parent=0 // pred_region
    _
  $region9: #{vit_forward.15} parent=0 // pred_fallthru
    _
  // Predicated region
  $region10: #{vit_forward.15} parent=0 // pred_check
    _
  $region11: #{vit_forward.15} parent=0 // pred_check_branch
    %14 = sbr.rel (0) target = $region13
  $region12: #{vit_forward.15} parent=0 // pred_region
    _
  $region13: #{vit_forward.15} parent=0 // pred_fallthru
    _
  // Predicated region
  $region14: #{vit_forward.15} parent=0 // pred_check
    _
  $region15: #{vit_forward.15} parent=0 // pred_check_branch
    %16 = sbr.rel (0) target = $region17
  $region16: #{vit_forward.15} parent=0 // pred_region
    _
  $region17: #{vit_forward.15} parent=0 // pred_fallthru
    _
  %v17 = vld [vmem:[%s0] sm:$0xff]
  %v18 = vld [vmem:[%s0 + $0x8] sm:$0x3]
  %v19 = vld [vmem:[%s1] sm:$0xff]
  %v20 = vld [vmem:[%s1 + $0x8] sm:$0xff]
  %v21 = vld [vmem:[%s1 + $0x10] sm:$0xff]
  %v22 = vld [vmem:[%s1 + $0x18] sm:$0xff]
  %v23 = vld [vmem:[%s2] sm:$0x1]
  %v25 = vperm.slane %v23, 0
  %vm27 = vcmask 261120
  %v29 = vsel %vm27, %v17, 0
  %v32 = vsel %vm27, %v18, 0
  %34 = vmatpush.msra.mxu0 0.0
  %35 = vmatpush.msra.mxu0 0.0
  %36 = vmatpush.msra.mxu0 0.0
  %37 = vmatpush.msra.mxu0 0.0
  %38 = vmatpush.msra.mxu0 0.0
  %39 = vmatpush.msra.mxu0 0.0
  %40 = vmatpush.msra.mxu0 0.0
  %41 = vmatpush.msra.mxu0 0.0
  %42 = vmatpush.msra.mxu0 0.0
  %43 = vmatpush.msra.mxu0 0.0
  %44 = vmatpush.msra.mxu0 0.0
  %45 = vmatpush.msra.mxu0 0.0
  %46 = vmatpush.msra.mxu0 %v22
  %47 = vmatpush.msra.mxu0 %v21
  %48 = vmatpush.msra.mxu0 %v20
  %49 = vmatpush.msra.mxu0 %v19
  %50 = vmatmul.f32.gmra.mxu0 %v29
  %v51 = vpop.f32.mrf.mxu0
  %v52 = vadd.f32 %v25, %v51
  %53 = vmatmul.f32.gmra.mxu0 %v32
  %v54 = vpop.f32.mrf.mxu0
  %v55 = vadd.f32 %v25, %v54
  %56 = vdwg.mxu0
  %v57 = vld [vmem:[%s3] sm:$0xff]
  %v58 = vld [vmem:[%s3 + $0x8] sm:$0x3]
  %v59 = vadd.f32 %v52, %v57
  %v60 = vadd.f32 %v55, %v58
  %61 = vst.msk [vmem:[%s4] sm:$0xff] %vm27, %v59
  %vm62 = vcmask 254976
  %63 = vst.msk [vmem:[%s4 + $0x8] sm:$0x3] %vm62, %v60
  // Predicated region
  $region18: #{vit_forward.15} parent=0 // pred_check
    _
  $region19: #{vit_forward.15} parent=0 // pred_check_branch
    %65 = sbr.rel (0) target = $region21
  $region20: #{vit_forward.15} parent=0 // pred_region
    _
  $region21: #{vit_forward.15} parent=0 // pred_fallthru
    _
  // Predicated region
  $region22: #{vit_forward.15} parent=0 // pred_check
    _
  $region23: #{vit_forward.15} parent=0 // pred_check_branch
    %67 = sbr.rel (0) target = $region25
  $region24: #{vit_forward.15} parent=0 // pred_region
    _
  $region25: #{vit_forward.15} parent=0 // pred_fallthru
    _

// kernel: vit_forward.16
$region0: #{vit_forward.16}
  #allocation0 [shape = 'u32[]', space=smem, size = 0x4, offset = 0x4, fixed_abs, tag = 'smem constant byte address 0x4 - core index']
  #allocation1 [shape = 'u32[72,128]{1,0:T(1,128)}', space=vmem, size = 0x9000, scoped, tag = 'internal scratch']
  %s0 = inlined_call_operand.vmem [shape: f32[10,32], index: 0, kind: input, shape index: {}]
  %s1 = inlined_call_operand.vmem [shape: f32[32,64], index: 1, kind: input, shape index: {}]
  %s2 = inlined_call_operand.vmem [shape: f32[1,64], index: 2, kind: input, shape index: {}]
  %s3 = inlined_call_operand.vmem [shape: f32[1,32], index: 3, kind: input, shape index: {}]
  %s4 = inlined_call_operand.vmem [shape: f32[1,32], index: 4, kind: input, shape index: {}]
  %s5 = inlined_call_operand.vmem [shape: f32[10,64], index: 5, kind: output, shape index: {}]
  %s6 = sld [smem:[#allocation0]]
  $region30: #{vit_forward.16} parent=0
    _
  %s8 = ssub.s32 1, %s6
  %s9 = scalar_select 0, %s8, %s6
  // Predicated region
  $region2: #{vit_forward.16} parent=0 // pred_check
    _
  $region3: #{vit_forward.16} parent=0 // pred_check_branch
    %11 = sbr.rel (0) target = $region5
  $region4: #{vit_forward.16} parent=0 // pred_region
    _
  $region5: #{vit_forward.16} parent=0 // pred_fallthru
    _
  // Predicated region
  $region6: #{vit_forward.16} parent=0 // pred_check
    _
  $region7: #{vit_forward.16} parent=0 // pred_check_branch
    %13 = sbr.rel (0) target = $region9
  $region8: #{vit_forward.16} parent=0 // pred_region
    _
  $region9: #{vit_forward.16} parent=0 // pred_fallthru
    _
  // Predicated region
  $region10: #{vit_forward.16} parent=0 // pred_check
    _
  $region11: #{vit_forward.16} parent=0 // pred_check_branch
    %15 = sbr.rel (0) target = $region13
  $region12: #{vit_forward.16} parent=0 // pred_region
    _
  $region13: #{vit_forward.16} parent=0 // pred_fallthru
    _
  // Predicated region
  $region14: #{vit_forward.16} parent=0 // pred_check
    _
  $region15: #{vit_forward.16} parent=0 // pred_check_branch
    %17 = sbr.rel (0) target = $region17
  $region16: #{vit_forward.16} parent=0 // pred_region
    _
  $region17: #{vit_forward.16} parent=0 // pred_fallthru
    _
  // Predicated region
  $region18: #{vit_forward.16} parent=0 // pred_check
    _
  $region19: #{vit_forward.16} parent=0 // pred_check_branch
    %19 = sbr.rel (0) target = $region21
  $region20: #{vit_forward.16} parent=0 // pred_region
    _
  $region21: #{vit_forward.16} parent=0 // pred_fallthru
    _
  %v20 = vld [vmem:[%s0] sm:$0xff]
  %v21 = vld [vmem:[%s0 + $0x8] sm:$0x3]
  %vm22 = vcmask 261120
  %v23 = vsel %vm22, %v20, 0.0
  %24 = vadd.xlane.f32.xlu0 %v23
  %v25 = vpop.xlane.xlu0 %24
  %vm26 = vcmask 254976
  %v27 = vsel %vm26, %v21, 0.0
  %28 = vadd.xlane.f32.xlu0 %v27
  %v29 = vpop.xlane.xlu0 %28
  %v30 = vrcp.pop 32.0
  %v31 = vmul.f32 32.0, %v30
  %v32 = vsub.f32 1.0, %v31
  %v33 = vmul.f32 %v30, %v32
  %v34 = vadd.f32 %v30, %v33
  %vm35 = vweird.f32 %v30
  %v36 = vsel %vm35, %v30, %v34
  %v37 = vmul.f32 %v25, %v36
  %v38 = vmul.f32 %v29, %v36
  %v39 = vsub.f32 %v20, %v37
  %v40 = vsub.f32 %v21, %v38
  %v41 = vmul.f32 %v39, %v39
  %v42 = vmul.f32 %v40, %v40
  %v43 = vsel %vm22, %v41, 0.0
  %44 = vadd.xlane.f32.xlu0 %v43
  %v45 = vpop.xlane.xlu0 %44
  %v46 = vsel %vm26, %v42, 0.0
  %47 = vadd.xlane.f32.xlu0 %v46
  %v48 = vpop.xlane.xlu0 %47
  %v49 = vmul.f32 %v45, %v36
  %v50 = vmul.f32 %v48, %v36
  %v51 = vadd.f32 %v49, 1e-12
  %v52 = vadd.f32 %v50, 1e-12
  %v53 = vrsqrt.pop %v51
  %v54 = vmul.f32 %v53, %v51
  %v55 = vmul.f32 %v54, %v53
  %v56 = vmul.f32 0.5, %v55
  %v57 = vsub.f32 1.5, %v56
  %v58 = vmul.f32 %v53, %v57
  %vm59 = vweird.f32 %v51
  %vm60 = vweird.f32 %v53
  %vm61 = vmor %vm59, %vm60
  %v62 = vsel %vm61, %v53, %v58
  %v63 = vrsqrt.pop %v52
  %v64 = vmul.f32 %v63, %v52
  %v65 = vmul.f32 %v64, %v63
  %v66 = vmul.f32 0.5, %v65
  %v67 = vsub.f32 1.5, %v66
  %v68 = vmul.f32 %v63, %v67
  %vm69 = vweird.f32 %v52
  %vm70 = vweird.f32 %v63
  %vm71 = vmor %vm69, %vm70
  %v72 = vsel %vm71, %v63, %v68
  %v73 = vmul.f32 %v39, %v62
  %v74 = vmul.f32 %v40, %v72
  %v75 = vld [vmem:[%s3] sm:$0x1]
  %v77 = vperm.slane %v75, 0
  %v79 = vmul.f32 %v73, %v77
  %v80 = vmul.f32 %v74, %v77
  %v81 = vld [vmem:[%s4] sm:$0x1]
  %v83 = vperm.slane %v81, 0
  %v85 = vadd.f32 %v79, %v83
  %v86 = vadd.f32 %v80, %v83
  %v87 = vld [vmem:[%s1] sm:$0xff]
  %v88 = vld [vmem:[%s1 + $0x8] sm:$0xff]
  %v89 = vld [vmem:[%s1 + $0x10] sm:$0xff]
  %v90 = vld [vmem:[%s1 + $0x18] sm:$0xff]
  %v91 = vld [vmem:[%s2] sm:$0x1]
  %v93 = vperm.slane %v91, 0
  %v96 = vsel %vm22, %v85, 0
  %v99 = vsel %vm22, %v86, 0
  %101 = vmatpush.msra.mxu0 0.0
  %102 = vmatpush.msra.mxu0 0.0
  %103 = vmatpush.msra.mxu0 0.0
  %104 = vmatpush.msra.mxu0 0.0
  %105 = vmatpush.msra.mxu0 0.0
  %106 = vmatpush.msra.mxu0 0.0
  %107 = vmatpush.msra.mxu0 0.0
  %108 = vmatpush.msra.mxu0 0.0
  %109 = vmatpush.msra.mxu0 0.0
  %110 = vmatpush.msra.mxu0 0.0
  %111 = vmatpush.msra.mxu0 0.0
  %112 = vmatpush.msra.mxu0 0.0
  %113 = vmatpush.msra.mxu0 %v90
  %114 = vmatpush.msra.mxu0 %v89
  %115 = vmatpush.msra.mxu0 %v88
  %116 = vmatpush.msra.mxu0 %v87
  %117 = vmatmul.f32.gmra.mxu0 %v96
  %v118 = vpop.f32.mrf.mxu0
  %v119 = vadd.f32 %v93, %v118
  %120 = vmatmul.f32.gmra.mxu0 %v99
  %v121 = vpop.f32.mrf.mxu0
  %v122 = vadd.f32 %v93, %v121
  %123 = vdwg.mxu0
  %v124 = vmul.f32 %v119, %v119
  %v125 = vmul.f32 %v122, %v122
  %v126 = vmul.f32 %v119, %v124
  %v127 = vmul.f32 %v122, %v125
  %v128 = vmul.f32 %v126, 0.044715
  %v129 = vmul.f32 %v127, 0.044715
  %v130 = vadd.f32 %v119, %v128
  %v131 = vadd.f32 %v122, %v129
  %v132 = vmul.f32 %v130, 0.7978846
  %v133 = vmul.f32 %v131, 0.7978846
  %v134 = vtanh.pop %v132
  %v135 = vtanh.pop %v133
  %v136 = vadd.f32 %v134, 1.0
  %v137 = vadd.f32 %v135, 1.0
  %v138 = vmul.f32 %v136, 0.5
  %v139 = vmul.f32 %v137, 0.5
  %v140 = vmul.f32 %v119, %v138
  %v141 = vmul.f32 %v122, %v139
  %vm142 = vcmask 523264
  %143 = vst.msk [vmem:[%s5] sm:$0xff] %vm142, %v140
  %vm144 = vcmask 517120
  %145 = vst.msk [vmem:[%s5 + $0x8] sm:$0x3] %vm144, %v141
  // Predicated region
  $region22: #{vit_forward.16} parent=0 // pred_check
    _
  $region23: #{vit_forward.16} parent=0 // pred_check_branch
    %147 = sbr.rel (0) target = $region25
  $region24: #{vit_forward.16} parent=0 // pred_region
    _
  $region25: #{vit_forward.16} parent=0 // pred_fallthru
    _
  // Predicated region
  $region26: #{vit_forward.16} parent=0 // pred_check
    _
  $region27: #{vit_forward.16} parent=0 // pred_check_branch
    %149 = sbr.rel (0) target = $region29
  $region28: #{vit_forward.16} parent=0 // pred_region
    _
  $region29: #{vit_forward.16} parent=0 // pred_fallthru
    _

// kernel: vit_forward.17
$region0: #{vit_forward.17}
  #allocation0 [shape = 'u32[]', space=smem, size = 0x4, offset = 0x4, fixed_abs, tag = 'smem constant byte address 0x4 - core index']
  #allocation1 [shape = 'u32[72,128]{1,0:T(1,128)}', space=vmem, size = 0x9000, scoped, tag = 'internal scratch']
  %s0 = inlined_call_operand.vmem [shape: f32[10,64], index: 0, kind: input, shape index: {}]
  %s1 = inlined_call_operand.vmem [shape: f32[64,32], index: 1, kind: input, shape index: {}]
  %s2 = inlined_call_operand.vmem [shape: f32[1,32], index: 2, kind: input, shape index: {}]
  %s3 = inlined_call_operand.vmem [shape: f32[10,32], index: 3, kind: input, shape index: {}]
  %s4 = inlined_call_operand.vmem [shape: f32[10,32], index: 4, kind: output, shape index: {}]
  %s5 = sld [smem:[#allocation0]]
  $region26: #{vit_forward.17} parent=0
    _
  %s7 = ssub.s32 1, %s5
  %s8 = scalar_select 0, %s7, %s5
  // Predicated region
  $region2: #{vit_forward.17} parent=0 // pred_check
    _
  $region3: #{vit_forward.17} parent=0 // pred_check_branch
    %10 = sbr.rel (0) target = $region5
  $region4: #{vit_forward.17} parent=0 // pred_region
    _
  $region5: #{vit_forward.17} parent=0 // pred_fallthru
    _
  // Predicated region
  $region6: #{vit_forward.17} parent=0 // pred_check
    _
  $region7: #{vit_forward.17} parent=0 // pred_check_branch
    %12 = sbr.rel (0) target = $region9
  $region8: #{vit_forward.17} parent=0 // pred_region
    _
  $region9: #{vit_forward.17} parent=0 // pred_fallthru
    _
  // Predicated region
  $region10: #{vit_forward.17} parent=0 // pred_check
    _
  $region11: #{vit_forward.17} parent=0 // pred_check_branch
    %14 = sbr.rel (0) target = $region13
  $region12: #{vit_forward.17} parent=0 // pred_region
    _
  $region13: #{vit_forward.17} parent=0 // pred_fallthru
    _
  // Predicated region
  $region14: #{vit_forward.17} parent=0 // pred_check
    _
  $region15: #{vit_forward.17} parent=0 // pred_check_branch
    %16 = sbr.rel (0) target = $region17
  $region16: #{vit_forward.17} parent=0 // pred_region
    _
  $region17: #{vit_forward.17} parent=0 // pred_fallthru
    _
  %v17 = vld [vmem:[%s0] sm:$0xff]
  %v18 = vld [vmem:[%s0 + $0x8] sm:$0x3]
  %v19 = vld [vmem:[%s1] sm:$0xff]
  %v20 = vld [vmem:[%s1 + $0x8] sm:$0xff]
  %v21 = vld [vmem:[%s1 + $0x10] sm:$0xff]
  %v22 = vld [vmem:[%s1 + $0x18] sm:$0xff]
  %v23 = vld [vmem:[%s1 + $0x20] sm:$0xff]
  %v24 = vld [vmem:[%s1 + $0x28] sm:$0xff]
  %v25 = vld [vmem:[%s1 + $0x30] sm:$0xff]
  %v26 = vld [vmem:[%s1 + $0x38] sm:$0xff]
  %v27 = vld [vmem:[%s2] sm:$0x1]
  %v29 = vperm.slane %v27, 0
  %vm31 = vcmask 523264
  %v33 = vsel %vm31, %v17, 0
  %v36 = vsel %vm31, %v18, 0
  %38 = vmatpush.msra.mxu0 0.0
  %39 = vmatpush.msra.mxu0 0.0
  %40 = vmatpush.msra.mxu0 0.0
  %41 = vmatpush.msra.mxu0 0.0
  %42 = vmatpush.msra.mxu0 0.0
  %43 = vmatpush.msra.mxu0 0.0
  %44 = vmatpush.msra.mxu0 0.0
  %45 = vmatpush.msra.mxu0 0.0
  %46 = vmatpush.msra.mxu0 %v26
  %47 = vmatpush.msra.mxu0 %v25
  %48 = vmatpush.msra.mxu0 %v24
  %49 = vmatpush.msra.mxu0 %v23
  %50 = vmatpush.msra.mxu0 %v22
  %51 = vmatpush.msra.mxu0 %v21
  %52 = vmatpush.msra.mxu0 %v20
  %53 = vmatpush.msra.mxu0 %v19
  %54 = vmatmul.f32.gmra.mxu0 %v33
  %v55 = vpop.f32.mrf.mxu0
  %v56 = vadd.f32 %v29, %v55
  %57 = vmatmul.f32.gmra.mxu0 %v36
  %v58 = vpop.f32.mrf.mxu0
  %v59 = vadd.f32 %v29, %v58
  %60 = vdwg.mxu0
  %v61 = vld [vmem:[%s3] sm:$0xff]
  %v62 = vld [vmem:[%s3 + $0x8] sm:$0x3]
  %v63 = vadd.f32 %v56, %v61
  %v64 = vadd.f32 %v59, %v62
  %vm65 = vcmask 261120
  %66 = vst.msk [vmem:[%s4] sm:$0xff] %vm65, %v63
  %vm67 = vcmask 254976
  %68 = vst.msk [vmem:[%s4 + $0x8] sm:$0x3] %vm67, %v64
  // Predicated region
  $region18: #{vit_forward.17} parent=0 // pred_check
    _
  $region19: #{vit_forward.17} parent=0 // pred_check_branch
    %70 = sbr.rel (0) target = $region21
  $region20: #{vit_forward.17} parent=0 // pred_region
    _
  $region21: #{vit_forward.17} parent=0 // pred_fallthru
    _
  // Predicated region
  $region22: #{vit_forward.17} parent=0 // pred_check
    _
  $region23: #{vit_forward.17} parent=0 // pred_check_branch
    %72 = sbr.rel (0) target = $region25
  $region24: #{vit_forward.17} parent=0 // pred_region
    _
  $region25: #{vit_forward.17} parent=0 // pred_fallthru
    _

// kernel: vit_forward.23
$region0: #{vit_forward.23}
  #allocation0 [shape = 'u32[]', space=smem, size = 0x4, offset = 0x4, fixed_abs, tag = 'smem constant byte address 0x4 - core index']
  #allocation1 [shape = 'u32[72,128]{1,0:T(1,128)}', space=vmem, size = 0x9000, scoped, tag = 'internal scratch']
  %s0 = inlined_call_operand.vmem [shape: f32[10,32], index: 0, kind: input, shape index: {}]
  %s1 = inlined_call_operand.vmem [shape: f32[1,32], index: 1, kind: input, shape index: {}]
  %s2 = inlined_call_operand.vmem [shape: f32[1,32], index: 2, kind: input, shape index: {}]
  %s3 = inlined_call_operand.vmem [shape: f32[10,32], index: 3, kind: output, shape index: {}]
  %s4 = sld [smem:[#allocation0]]
  $region22: #{vit_forward.23} parent=0
    _
  %s6 = ssub.s32 1, %s4
  %s7 = scalar_select 0, %s6, %s4
  // Predicated region
  $region2: #{vit_forward.23} parent=0 // pred_check
    _
  $region3: #{vit_forward.23} parent=0 // pred_check_branch
    %9 = sbr.rel (0) target = $region5
  $region4: #{vit_forward.23} parent=0 // pred_region
    _
  $region5: #{vit_forward.23} parent=0 // pred_fallthru
    _
  // Predicated region
  $region6: #{vit_forward.23} parent=0 // pred_check
    _
  $region7: #{vit_forward.23} parent=0 // pred_check_branch
    %11 = sbr.rel (0) target = $region9
  $region8: #{vit_forward.23} parent=0 // pred_region
    _
  $region9: #{vit_forward.23} parent=0 // pred_fallthru
    _
  // Predicated region
  $region10: #{vit_forward.23} parent=0 // pred_check
    _
  $region11: #{vit_forward.23} parent=0 // pred_check_branch
    %13 = sbr.rel (0) target = $region13
  $region12: #{vit_forward.23} parent=0 // pred_region
    _
  $region13: #{vit_forward.23} parent=0 // pred_fallthru
    _
  %v14 = vld [vmem:[%s0] sm:$0xff]
  %v15 = vld [vmem:[%s0 + $0x8] sm:$0x3]
  %vm16 = vcmask 261120
  %v17 = vsel %vm16, %v14, 0.0
  %18 = vadd.xlane.f32.xlu0 %v17
  %v19 = vpop.xlane.xlu0 %18
  %vm20 = vcmask 254976
  %v21 = vsel %vm20, %v15, 0.0
  %22 = vadd.xlane.f32.xlu0 %v21
  %v23 = vpop.xlane.xlu0 %22
  %v24 = vrcp.pop 32.0
  %v25 = vmul.f32 32.0, %v24
  %v26 = vsub.f32 1.0, %v25
  %v27 = vmul.f32 %v24, %v26
  %v28 = vadd.f32 %v24, %v27
  %vm29 = vweird.f32 %v24
  %v30 = vsel %vm29, %v24, %v28
  %v31 = vmul.f32 %v19, %v30
  %v32 = vmul.f32 %v23, %v30
  %v33 = vsub.f32 %v14, %v31
  %v34 = vsub.f32 %v15, %v32
  %v35 = vmul.f32 %v33, %v33
  %v36 = vmul.f32 %v34, %v34
  %v37 = vsel %vm16, %v35, 0.0
  %38 = vadd.xlane.f32.xlu0 %v37
  %v39 = vpop.xlane.xlu0 %38
  %v40 = vsel %vm20, %v36, 0.0
  %41 = vadd.xlane.f32.xlu0 %v40
  %v42 = vpop.xlane.xlu0 %41
  %v43 = vmul.f32 %v39, %v30
  %v44 = vmul.f32 %v42, %v30
  %v45 = vadd.f32 %v43, 1e-12
  %v46 = vadd.f32 %v44, 1e-12
  %v47 = vrsqrt.pop %v45
  %v48 = vmul.f32 %v47, %v45
  %v49 = vmul.f32 %v48, %v47
  %v50 = vmul.f32 0.5, %v49
  %v51 = vsub.f32 1.5, %v50
  %v52 = vmul.f32 %v47, %v51
  %vm53 = vweird.f32 %v45
  %vm54 = vweird.f32 %v47
  %vm55 = vmor %vm53, %vm54
  %v56 = vsel %vm55, %v47, %v52
  %v57 = vrsqrt.pop %v46
  %v58 = vmul.f32 %v57, %v46
  %v59 = vmul.f32 %v58, %v57
  %v60 = vmul.f32 0.5, %v59
  %v61 = vsub.f32 1.5, %v60
  %v62 = vmul.f32 %v57, %v61
  %vm63 = vweird.f32 %v46
  %vm64 = vweird.f32 %v57
  %vm65 = vmor %vm63, %vm64
  %v66 = vsel %vm65, %v57, %v62
  %v67 = vmul.f32 %v33, %v56
  %v68 = vmul.f32 %v34, %v66
  %v69 = vld [vmem:[%s1] sm:$0x1]
  %v71 = vperm.slane %v69, 0
  %v73 = vmul.f32 %v67, %v71
  %v74 = vmul.f32 %v68, %v71
  %v75 = vld [vmem:[%s2] sm:$0x1]
  %v77 = vperm.slane %v75, 0
  %v79 = vadd.f32 %v73, %v77
  %v80 = vadd.f32 %v74, %v77
  %81 = vst.msk [vmem:[%s3] sm:$0xff] %vm16, %v79
  %82 = vst.msk [vmem:[%s3 + $0x8] sm:$0x3] %vm20, %v80
  // Predicated region
  $region14: #{vit_forward.23} parent=0 // pred_check
    _
  $region15: #{vit_forward.23} parent=0 // pred_check_branch
    %84 = sbr.rel (0) target = $region17
  $region16: #{vit_forward.23} parent=0 // pred_region
    _
  $region17: #{vit_forward.23} parent=0 // pred_fallthru
    _
  // Predicated region
  $region18: #{vit_forward.23} parent=0 // pred_check
    _
  $region19: #{vit_forward.23} parent=0 // pred_check_branch
    %86 = sbr.rel (0) target = $region21
  $region20: #{vit_forward.23} parent=0 // pred_region
    _
  $region21: #{vit_forward.23} parent=0 // pred_fallthru
    _

</llo_original>
